<compile_context>
chip_gen: v7x
topology: tpu7x:2x2x1
jax: 0.10.0
libtpu: 0.0.40
codegen_flags: <defaults>
</compile_context>

<pallas_src>
import jax
import jax.numpy as jnp
from jax.experimental import pallas as pl
from jax.experimental.pallas import tpu as pltpu

EPS = 1e-5


def resnet_block_kernel(x_ref, wb1_ref, bias1_ref, g1_ref, be1_ref,
                        wb2_ref, bias2_ref, g2_ref, be2_ref,
                        fold_ref, foldT_ref, o_ref, pad_ref):
    # x_ref / o_ref : (N*H, W*C)     lane-dense activations
    # wb*_ref       : (3, W*C, W*C)  block-tridiagonal per-dy conv weights
    # bias*_ref     : (1, W*C)       conv bias tiled over w
    # g*/be*_ref    : (1, C)         BN gamma / beta
    # fold_ref      : (W*C, C)       0/1 lane -> channel folding matrix
    # foldT_ref     : (C, W*C)       its transpose (channel -> lane tile-back)
    # pad_ref       : (N, H+2, W*C)  VMEM scratch (H halo only; W pad is in wb)
    N, Hp, WC = pad_ref.shape
    H = Hp - 2
    NH = N * H
    C = fold_ref.shape[1]
    W = WC // C
    inv_m = 1.0 / (NH * W)

    # Zero only the 1-row H halo, once; the interior is fully rewritten by
    # each conv before it is read.
    zero_row = jnp.zeros((N, 1, WC), jnp.float32)
    pad_ref[:, pl.ds(0, 1), :] = zero_row
    pad_ref[:, pl.ds(Hp - 1, 1), :] = zero_row

    def conv3x3(src, wb_ref, bias_ref):
        # src: (NH, WC) f32.  The dy=1 tap is src itself; dy=0/2 taps are
        # H-shifted views staged through the halo-padded scratch.  Each tap is
        # one lane-dense (NH, WC) @ (WC, WC) MXU matmul; the accumulator stays
        # ~4 vregs.
        pad_ref[:, pl.ds(1, H), :] = src.reshape(N, H, WC)
        acc = jnp.dot(src, wb_ref[1], preferred_element_type=jnp.float32)
        acc = acc + jnp.dot(pad_ref[:, pl.ds(0, H), :].reshape(NH, WC),
                            wb_ref[0], preferred_element_type=jnp.float32)
        acc = acc + jnp.dot(pad_ref[:, pl.ds(2, H), :].reshape(NH, WC),
                            wb_ref[2], preferred_element_type=jnp.float32)
        return acc + bias_ref[...]

    def batchnorm(y, g_ref, be_ref):
        # Single-pass batch stats: sublane-reduce to per-lane sums, fold the W
        # lane groups to per-channel with a tiny matmul, then tile scale/shift
        # back to the lane-dense layout with the transposed fold.
        s = jnp.sum(y, axis=0, keepdims=True)                       # (1, WC)
        sq = jnp.sum(y * y, axis=0, keepdims=True)                  # (1, WC)
        s_c = jnp.dot(s, fold_ref[...], preferred_element_type=jnp.float32)
        sq_c = jnp.dot(sq, fold_ref[...], preferred_element_type=jnp.float32)
        mean = s_c * inv_m                                          # (1, C)
        var = sq_c * inv_m - mean * mean                            # biased
        inv = jax.lax.rsqrt(var + EPS)                              # EUP
        scale_c = g_ref[...] * inv                                  # (1, C)
        shift_c = be_ref[...] - mean * scale_c                      # (1, C)
        scale = jnp.dot(scale_c, foldT_ref[...],
                        preferred_element_type=jnp.float32)         # (1, WC)
        shift = jnp.dot(shift_c, foldT_ref[...],
                        preferred_element_type=jnp.float32)         # (1, WC)
        return y * scale + shift

    x = x_ref[...].astype(jnp.float32)                              # (NH, WC)
    h = conv3x3(x, wb1_ref, bias1_ref)
    h = jnp.maximum(batchnorm(h, g1_ref, be1_ref), 0.0)
    h = conv3x3(h, wb2_ref, bias2_ref)
    h = batchnorm(h, g2_ref, be2_ref)
    o_ref[...] = jnp.maximum(h + 0.5 * x, 0.0).astype(o_ref.dtype)


def _banded_conv_weights(w_hwio, W):
    # Fold the 3 dx taps + W-boundary zero padding of a 3x3 SAME conv into one
    # block-tridiagonal (W*C, W*Co) matrix per dy tap:
    #   B[dy][wi*C + ci, wo*Co + co] = w[dy, wi - wo + 1, ci, co]  if |wi-wo|<=1
    kh, kw, C, Co = w_hwio.shape
    wi = jnp.arange(W)[:, None]
    wo = jnp.arange(W)[None, :]
    diff = wi - wo                                                   # (W, W)
    valid = (jnp.abs(diff) <= 1).astype(w_hwio.dtype)                # (W, W)
    kx = jnp.clip(diff + 1, 0, kw - 1)                               # (W, W)
    blocks = w_hwio[:, kx, :, :] * valid[None, :, :, None, None]     # (3,W,W,C,Co)
    return blocks.transpose(0, 1, 3, 2, 4).reshape(kh, W * C, W * Co)


@jax.jit
def resnet_block(x, w1, b1, g1, be1, w2, b2, g2, be2):
    N, H, W, C = x.shape
    WC = W * C
    f32 = jnp.float32
    row = lambda v: v.reshape(1, C).astype(f32)
    tiled = lambda v: jnp.tile(v.reshape(1, C).astype(f32), (1, W))

    x2d = x.reshape(N * H, WC)                        # lane-dense (N*H, 128)
    wb1 = _banded_conv_weights(w1.astype(f32), W)     # (3, WC, WC)
    wb2 = _banded_conv_weights(w2.astype(f32), W)
    fold = jnp.tile(jnp.eye(C, dtype=f32), (W, 1))    # (WC, C)
    foldT = fold.T                                    # (C, WC)

    vmem = pl.BlockSpec(memory_space=pltpu.MemorySpace.VMEM)
    out2d = pl.pallas_call(
        resnet_block_kernel,
        out_shape=jax.ShapeDtypeStruct((N * H, WC), x.dtype),
        in_specs=[vmem] * 11,
        out_specs=vmem,
        scratch_shapes=[pltpu.VMEM((N, H + 2, WC), jnp.float32)],
    )(x2d, wb1, tiled(b1), row(g1), row(be1),
      wb2, tiled(b2), row(g2), row(be2), fold, foldT)
    # TODO(synk): for v7x (2 TensorCores) add a "parallel" grid over N/H bands;
    # BN batch stats then need a cross-tile sum/sum-sq reduction (two-phase or
    # an "arbitrary" reduction axis), so it is intentionally left gridless at
    # this toy size.
    return out2d.reshape(N, H, W, C)


def ref_forward(x, w1, b1, g1, be1, w2, b2, g2, be2):
    # pure-JAX reference (NHWC / HWIO), training-mode batch-norm.
    def conv(x, w, b):
        y = jax.lax.conv_general_dilated(
            x, w, window_strides=(1, 1), padding="SAME",
            dimension_numbers=("NHWC", "HWIO", "NHWC"))
        return y + b.reshape(1, 1, 1, -1)

    def bn(y, g, be):
        mean = y.mean(axis=(0, 1, 2), keepdims=True)
        var = ((y - mean) ** 2).mean(axis=(0, 1, 2), keepdims=True)
        return ((y - mean) * jax.lax.rsqrt(var + EPS)
                * g.reshape(1, 1, 1, -1) + be.reshape(1, 1, 1, -1))

    h = jax.nn.relu(bn(conv(x, w1, b1), g1, be1))
    h = bn(conv(h, w2, b2), g2, be2)
    return jax.nn.relu(h + 0.5 * x)


if __name__ == "__main__":
    N, H, W, C = 2, 16, 16, 8   # hidden_dim = 8  ->  W*C = 128 lanes
    key = jax.random.PRNGKey(0)
    ks = jax.random.split(key, 9)

    x = jax.random.normal(ks[0], (N, H, W, C), jnp.float32)
    w1 = jax.random.normal(ks[1], (3, 3, C, C), jnp.float32) * 0.1   # HWIO
    b1 = jax.random.normal(ks[2], (C,), jnp.float32) * 0.1
    g1 = 1.0 + 0.1 * jax.random.normal(ks[3], (C,), jnp.float32)
    be1 = 0.1 * jax.random.normal(ks[4], (C,), jnp.float32)
    w2 = jax.random.normal(ks[5], (3, 3, C, C), jnp.float32) * 0.1
    b2 = jax.random.normal(ks[6], (C,), jnp.float32) * 0.1
    g2 = 1.0 + 0.1 * jax.random.normal(ks[7], (C,), jnp.float32)
    be2 = 0.1 * jax.random.normal(ks[8], (C,), jnp.float32)

    out = resnet_block(x, w1, b1, g1, be1, w2, b2, g2, be2)
    out = jax.block_until_ready(out)

    ref = ref_forward(x, w1, b1, g1, be1, w2, b2, g2, be2)
    assert out.shape == ref.shape and out.dtype == ref.dtype
    err = float(jnp.max(jnp.abs(out - ref)))
    assert jnp.allclose(out, ref, rtol=2e-3, atol=2e-3), err

    print("KERNEL_OK")
</pallas_src>

<mosaic_0001>
module attributes {stable_mosaic.version = 11 : i64} {
  func.func @resnet_block_kernel(%arg0: memref<32x128xf32, #tpu.memory_space<vmem>>, %arg1: memref<3x128x128xf32, #tpu.memory_space<vmem>>, %arg2: memref<1x128xf32, #tpu.memory_space<vmem>>, %arg3: memref<1x8xf32, #tpu.memory_space<vmem>>, %arg4: memref<1x8xf32, #tpu.memory_space<vmem>>, %arg5: memref<3x128x128xf32, #tpu.memory_space<vmem>>, %arg6: memref<1x128xf32, #tpu.memory_space<vmem>>, %arg7: memref<1x8xf32, #tpu.memory_space<vmem>>, %arg8: memref<1x8xf32, #tpu.memory_space<vmem>>, %arg9: memref<128x8xf32, #tpu.memory_space<vmem>>, %arg10: memref<8x128xf32, #tpu.memory_space<vmem>>, %arg11: memref<32x128xf32, #tpu.memory_space<vmem>>, %arg12: memref<2x18x128xf32, #tpu.memory_space<vmem>>) attributes {dimension_semantics = [], scalar_prefetch = 0 : i64, scratch_operands = 1 : i64, tpu.core_type = #tpu.core_type<tc>} {
    %cst = arith.constant 0.000000e+00 : f32
    %0 = vector.broadcast %cst : f32 to vector<2x1x128xf32>
    %c0 = arith.constant 0 : index
    %c0_0 = arith.constant 0 : index
    %c0_1 = arith.constant 0 : index
    %1 = vector.load %arg12[%c0, %c0_0, %c0_1] : memref<2x18x128xf32, #tpu.memory_space<vmem>>, vector<2x1x128xf32>
    tpu.vector_store %arg12[%c0, %c0_0, %c0_1], %0 {strides = array<i32>} : memref<2x18x128xf32, #tpu.memory_space<vmem>>, vector<2x1x128xf32>,
    %c0_2 = arith.constant 0 : index
    %c17 = arith.constant 17 : index
    %c0_3 = arith.constant 0 : index
    %2 = vector.load %arg12[%c0_2, %c17, %c0_3] : memref<2x18x128xf32, #tpu.memory_space<vmem>>, vector<2x1x128xf32>
    tpu.vector_store %arg12[%c0_2, %c17, %c0_3], %0 {strides = array<i32>} : memref<2x18x128xf32, #tpu.memory_space<vmem>>, vector<2x1x128xf32>,
    %c0_4 = arith.constant 0 : index
    %c0_5 = arith.constant 0 : index
    %3 = vector.load %arg0[%c0_4, %c0_5] : memref<32x128xf32, #tpu.memory_space<vmem>>, vector<32x128xf32>
    %4 = vector.shape_cast %3 : vector<32x128xf32> to vector<2x16x128xf32>
    %c0_6 = arith.constant 0 : index
    %c1 = arith.constant 1 : index
    %c0_7 = arith.constant 0 : index
    %5 = vector.load %arg12[%c0_6, %c1, %c0_7] : memref<2x18x128xf32, #tpu.memory_space<vmem>>, vector<2x16x128xf32>
    tpu.vector_store %arg12[%c0_6, %c1, %c0_7], %4 {strides = array<i32>} : memref<2x18x128xf32, #tpu.memory_space<vmem>>, vector<2x16x128xf32>,
    %c1_8 = arith.constant 1 : index
    %c0_9 = arith.constant 0 : index
    %c0_10 = arith.constant 0 : index
    %6 = vector.load %arg1[%c1_8, %c0_9, %c0_10] : memref<3x128x128xf32, #tpu.memory_space<vmem>>, vector<1x128x128xf32>
    %7 = vector.shape_cast %6 : vector<1x128x128xf32> to vector<128x128xf32>
    %cst_11 = arith.constant dense<0.000000e+00> : vector<32x128xf32>
    %8 = tpu.matmul %3, %7, %cst_11 {dimension_numbers = #tpu.dot_dimension_numbers<[1], [0], [0], [1], [0, 0, 1, 1], [], []>} : vector<32x128xf32>, vector<128x128xf32>, vector<32x128xf32> -> vector<32x128xf32>
    %c0_12 = arith.constant 0 : index
    %c0_13 = arith.constant 0 : index
    %c0_14 = arith.constant 0 : index
    %9 = vector.load %arg12[%c0_12, %c0_13, %c0_14] : memref<2x18x128xf32, #tpu.memory_space<vmem>>, vector<2x16x128xf32>
    %10 = vector.shape_cast %9 : vector<2x16x128xf32> to vector<32x128xf32>
    %c0_15 = arith.constant 0 : index
    %c0_16 = arith.constant 0 : index
    %c0_17 = arith.constant 0 : index
    %11 = vector.load %arg1[%c0_15, %c0_16, %c0_17] : memref<3x128x128xf32, #tpu.memory_space<vmem>>, vector<1x128x128xf32>
    %12 = vector.shape_cast %11 : vector<1x128x128xf32> to vector<128x128xf32>
    %cst_18 = arith.constant dense<0.000000e+00> : vector<32x128xf32>
    %13 = tpu.matmul %10, %12, %cst_18 {dimension_numbers = #tpu.dot_dimension_numbers<[1], [0], [0], [1], [0, 0, 1, 1], [], []>} : vector<32x128xf32>, vector<128x128xf32>, vector<32x128xf32> -> vector<32x128xf32>
    %14 = arith.addf %8, %13 : vector<32x128xf32>
    %c0_19 = arith.constant 0 : index
    %c2 = arith.constant 2 : index
    %c0_20 = arith.constant 0 : index
    %15 = vector.load %arg12[%c0_19, %c2, %c0_20] : memref<2x18x128xf32, #tpu.memory_space<vmem>>, vector<2x16x128xf32>
    %16 = vector.shape_cast %15 : vector<2x16x128xf32> to vector<32x128xf32>
    %c2_21 = arith.constant 2 : index
    %c0_22 = arith.constant 0 : index
    %c0_23 = arith.constant 0 : index
    %17 = vector.load %arg1[%c2_21, %c0_22, %c0_23] : memref<3x128x128xf32, #tpu.memory_space<vmem>>, vector<1x128x128xf32>
    %18 = vector.shape_cast %17 : vector<1x128x128xf32> to vector<128x128xf32>
    %cst_24 = arith.constant dense<0.000000e+00> : vector<32x128xf32>
    %19 = tpu.matmul %16, %18, %cst_24 {dimension_numbers = #tpu.dot_dimension_numbers<[1], [0], [0], [1], [0, 0, 1, 1], [], []>} : vector<32x128xf32>, vector<128x128xf32>, vector<32x128xf32> -> vector<32x128xf32>
    %20 = arith.addf %14, %19 : vector<32x128xf32>
    %c0_25 = arith.constant 0 : index
    %c0_26 = arith.constant 0 : index
    %21 = vector.load %arg2[%c0_25, %c0_26] : memref<1x128xf32, #tpu.memory_space<vmem>>, vector<1x128xf32>
    %22 = vector.broadcast %21 : vector<1x128xf32> to vector<32x128xf32>
    %23 = arith.addf %20, %22 : vector<32x128xf32>
    %cst_27 = arith.constant dense<0.000000e+00> : vector<128xf32>
    %24 = vector.multi_reduction <add>, %23, %cst_27 [0] : vector<32x128xf32> to vector<128xf32>
    %25 = vector.shape_cast %24 : vector<128xf32> to vector<1x128xf32>
    %26 = arith.mulf %23, %23 : vector<32x128xf32>
    %cst_28 = arith.constant dense<0.000000e+00> : vector<128xf32>
    %27 = vector.multi_reduction <add>, %26, %cst_28 [0] : vector<32x128xf32> to vector<128xf32>
    %28 = vector.shape_cast %27 : vector<128xf32> to vector<1x128xf32>
    %c0_29 = arith.constant 0 : index
    %c0_30 = arith.constant 0 : index
    %29 = vector.load %arg9[%c0_29, %c0_30] : memref<128x8xf32, #tpu.memory_space<vmem>>, vector<128x8xf32>
    %cst_31 = arith.constant dense<0.000000e+00> : vector<1x8xf32>
    %30 = tpu.matmul %25, %29, %cst_31 {dimension_numbers = #tpu.dot_dimension_numbers<[1], [0], [0], [1], [0, 0, 1, 1], [], []>} : vector<1x128xf32>, vector<128x8xf32>, vector<1x8xf32> -> vector<1x8xf32>
    %c0_32 = arith.constant 0 : index
    %c0_33 = arith.constant 0 : index
    %31 = vector.load %arg9[%c0_32, %c0_33] : memref<128x8xf32, #tpu.memory_space<vmem>>, vector<128x8xf32>
    %cst_34 = arith.constant dense<0.000000e+00> : vector<1x8xf32>
    %32 = tpu.matmul %28, %31, %cst_34 {dimension_numbers = #tpu.dot_dimension_numbers<[1], [0], [0], [1], [0, 0, 1, 1], [], []>} : vector<1x128xf32>, vector<128x8xf32>, vector<1x8xf32> -> vector<1x8xf32>
    %cst_35 = arith.constant 0.001953125 : f32
    %33 = vector.broadcast %cst_35 : f32 to vector<1x8xf32>
    %34 = arith.mulf %30, %33 : vector<1x8xf32>
    %cst_36 = arith.constant 0.001953125 : f32
    %35 = vector.broadcast %cst_36 : f32 to vector<1x8xf32>
    %36 = arith.mulf %32, %35 : vector<1x8xf32>
    %37 = arith.mulf %34, %34 : vector<1x8xf32>
    %38 = arith.subf %36, %37 : vector<1x8xf32>
    %cst_37 = arith.constant 9.99999974E-6 : f32
    %39 = vector.broadcast %cst_37 : f32 to vector<1x8xf32>
    %40 = arith.addf %38, %39 : vector<1x8xf32>
    %41 = math.rsqrt %40 : vector<1x8xf32>
    %c0_38 = arith.constant 0 : index
    %c0_39 = arith.constant 0 : index
    %42 = vector.load %arg3[%c0_38, %c0_39] : memref<1x8xf32, #tpu.memory_space<vmem>>, vector<1x8xf32>
    %43 = arith.mulf %42, %41 : vector<1x8xf32>
    %c0_40 = arith.constant 0 : index
    %c0_41 = arith.constant 0 : index
    %44 = vector.load %arg4[%c0_40, %c0_41] : memref<1x8xf32, #tpu.memory_space<vmem>>, vector<1x8xf32>
    %45 = arith.mulf %34, %43 : vector<1x8xf32>
    %46 = arith.subf %44, %45 : vector<1x8xf32>
    %c0_42 = arith.constant 0 : index
    %c0_43 = arith.constant 0 : index
    %47 = vector.load %arg10[%c0_42, %c0_43] : memref<8x128xf32, #tpu.memory_space<vmem>>, vector<8x128xf32>
    %cst_44 = arith.constant dense<0.000000e+00> : vector<1x128xf32>
    %48 = tpu.matmul %43, %47, %cst_44 {dimension_numbers = #tpu.dot_dimension_numbers<[1], [0], [0], [1], [0, 0, 1, 1], [], []>} : vector<1x8xf32>, vector<8x128xf32>, vector<1x128xf32> -> vector<1x128xf32>
    %c0_45 = arith.constant 0 : index
    %c0_46 = arith.constant 0 : index
    %49 = vector.load %arg10[%c0_45, %c0_46] : memref<8x128xf32, #tpu.memory_space<vmem>>, vector<8x128xf32>
    %cst_47 = arith.constant dense<0.000000e+00> : vector<1x128xf32>
    %50 = tpu.matmul %46, %49, %cst_47 {dimension_numbers = #tpu.dot_dimension_numbers<[1], [0], [0], [1], [0, 0, 1, 1], [], []>} : vector<1x8xf32>, vector<8x128xf32>, vector<1x128xf32> -> vector<1x128xf32>
    %51 = vector.broadcast %48 : vector<1x128xf32> to vector<32x128xf32>
    %52 = arith.mulf %23, %51 : vector<32x128xf32>
    %53 = vector.broadcast %50 : vector<1x128xf32> to vector<32x128xf32>
    %54 = arith.addf %52, %53 : vector<32x128xf32>
    %cst_48 = arith.constant 0.000000e+00 : f32
    %55 = vector.broadcast %cst_48 : f32 to vector<32x128xf32>
    %56 = arith.maximumf %54, %55 : vector<32x128xf32>
    %57 = vector.shape_cast %56 : vector<32x128xf32> to vector<2x16x128xf32>
    %c0_49 = arith.constant 0 : index
    %c1_50 = arith.constant 1 : index
    %c0_51 = arith.constant 0 : index
    %58 = vector.load %arg12[%c0_49, %c1_50, %c0_51] : memref<2x18x128xf32, #tpu.memory_space<vmem>>, vector<2x16x128xf32>
    tpu.vector_store %arg12[%c0_49, %c1_50, %c0_51], %57 {strides = array<i32>} : memref<2x18x128xf32, #tpu.memory_space<vmem>>, vector<2x16x128xf32>,
    %c1_52 = arith.constant 1 : index
    %c0_53 = arith.constant 0 : index
    %c0_54 = arith.constant 0 : index
    %59 = vector.load %arg5[%c1_52, %c0_53, %c0_54] : memref<3x128x128xf32, #tpu.memory_space<vmem>>, vector<1x128x128xf32>
    %60 = vector.shape_cast %59 : vector<1x128x128xf32> to vector<128x128xf32>
    %cst_55 = arith.constant dense<0.000000e+00> : vector<32x128xf32>
    %61 = tpu.matmul %56, %60, %cst_55 {dimension_numbers = #tpu.dot_dimension_numbers<[1], [0], [0], [1], [0, 0, 1, 1], [], []>} : vector<32x128xf32>, vector<128x128xf32>, vector<32x128xf32> -> vector<32x128xf32>
    %c0_56 = arith.constant 0 : index
    %c0_57 = arith.constant 0 : index
    %c0_58 = arith.constant 0 : index
    %62 = vector.load %arg12[%c0_56, %c0_57, %c0_58] : memref<2x18x128xf32, #tpu.memory_space<vmem>>, vector<2x16x128xf32>
    %63 = vector.shape_cast %62 : vector<2x16x128xf32> to vector<32x128xf32>
    %c0_59 = arith.constant 0 : index
    %c0_60 = arith.constant 0 : index
    %c0_61 = arith.constant 0 : index
    %64 = vector.load %arg5[%c0_59, %c0_60, %c0_61] : memref<3x128x128xf32, #tpu.memory_space<vmem>>, vector<1x128x128xf32>
    %65 = vector.shape_cast %64 : vector<1x128x128xf32> to vector<128x128xf32>
    %cst_62 = arith.constant dense<0.000000e+00> : vector<32x128xf32>
    %66 = tpu.matmul %63, %65, %cst_62 {dimension_numbers = #tpu.dot_dimension_numbers<[1], [0], [0], [1], [0, 0, 1, 1], [], []>} : vector<32x128xf32>, vector<128x128xf32>, vector<32x128xf32> -> vector<32x128xf32>
    %67 = arith.addf %61, %66 : vector<32x128xf32>
    %c0_63 = arith.constant 0 : index
    %c2_64 = arith.constant 2 : index
    %c0_65 = arith.constant 0 : index
    %68 = vector.load %arg12[%c0_63, %c2_64, %c0_65] : memref<2x18x128xf32, #tpu.memory_space<vmem>>, vector<2x16x128xf32>
    %69 = vector.shape_cast %68 : vector<2x16x128xf32> to vector<32x128xf32>
    %c2_66 = arith.constant 2 : index
    %c0_67 = arith.constant 0 : index
    %c0_68 = arith.constant 0 : index
    %70 = vector.load %arg5[%c2_66, %c0_67, %c0_68] : memref<3x128x128xf32, #tpu.memory_space<vmem>>, vector<1x128x128xf32>
    %71 = vector.shape_cast %70 : vector<1x128x128xf32> to vector<128x128xf32>
    %cst_69 = arith.constant dense<0.000000e+00> : vector<32x128xf32>
    %72 = tpu.matmul %69, %71, %cst_69 {dimension_numbers = #tpu.dot_dimension_numbers<[1], [0], [0], [1], [0, 0, 1, 1], [], []>} : vector<32x128xf32>, vector<128x128xf32>, vector<32x128xf32> -> vector<32x128xf32>
    %73 = arith.addf %67, %72 : vector<32x128xf32>
    %c0_70 = arith.constant 0 : index
    %c0_71 = arith.constant 0 : index
    %74 = vector.load %arg6[%c0_70, %c0_71] : memref<1x128xf32, #tpu.memory_space<vmem>>, vector<1x128xf32>
    %75 = vector.broadcast %74 : vector<1x128xf32> to vector<32x128xf32>
    %76 = arith.addf %73, %75 : vector<32x128xf32>
    %cst_72 = arith.constant dense<0.000000e+00> : vector<128xf32>
    %77 = vector.multi_reduction <add>, %76, %cst_72 [0] : vector<32x128xf32> to vector<128xf32>
    %78 = vector.shape_cast %77 : vector<128xf32> to vector<1x128xf32>
    %79 = arith.mulf %76, %76 : vector<32x128xf32>
    %cst_73 = arith.constant dense<0.000000e+00> : vector<128xf32>
    %80 = vector.multi_reduction <add>, %79, %cst_73 [0] : vector<32x128xf32> to vector<128xf32>
    %81 = vector.shape_cast %80 : vector<128xf32> to vector<1x128xf32>
    %c0_74 = arith.constant 0 : index
    %c0_75 = arith.constant 0 : index
    %82 = vector.load %arg9[%c0_74, %c0_75] : memref<128x8xf32, #tpu.memory_space<vmem>>, vector<128x8xf32>
    %cst_76 = arith.constant dense<0.000000e+00> : vector<1x8xf32>
    %83 = tpu.matmul %78, %82, %cst_76 {dimension_numbers = #tpu.dot_dimension_numbers<[1], [0], [0], [1], [0, 0, 1, 1], [], []>} : vector<1x128xf32>, vector<128x8xf32>, vector<1x8xf32> -> vector<1x8xf32>
    %c0_77 = arith.constant 0 : index
    %c0_78 = arith.constant 0 : index
    %84 = vector.load %arg9[%c0_77, %c0_78] : memref<128x8xf32, #tpu.memory_space<vmem>>, vector<128x8xf32>
    %cst_79 = arith.constant dense<0.000000e+00> : vector<1x8xf32>
    %85 = tpu.matmul %81, %84, %cst_79 {dimension_numbers = #tpu.dot_dimension_numbers<[1], [0], [0], [1], [0, 0, 1, 1], [], []>} : vector<1x128xf32>, vector<128x8xf32>, vector<1x8xf32> -> vector<1x8xf32>
    %cst_80 = arith.constant 0.001953125 : f32
    %86 = vector.broadcast %cst_80 : f32 to vector<1x8xf32>
    %87 = arith.mulf %83, %86 : vector<1x8xf32>
    %cst_81 = arith.constant 0.001953125 : f32
    %88 = vector.broadcast %cst_81 : f32 to vector<1x8xf32>
    %89 = arith.mulf %85, %88 : vector<1x8xf32>
    %90 = arith.mulf %87, %87 : vector<1x8xf32>
    %91 = arith.subf %89, %90 : vector<1x8xf32>
    %cst_82 = arith.constant 9.99999974E-6 : f32
    %92 = vector.broadcast %cst_82 : f32 to vector<1x8xf32>
    %93 = arith.addf %91, %92 : vector<1x8xf32>
    %94 = math.rsqrt %93 : vector<1x8xf32>
    %c0_83 = arith.constant 0 : index
    %c0_84 = arith.constant 0 : index
    %95 = vector.load %arg7[%c0_83, %c0_84] : memref<1x8xf32, #tpu.memory_space<vmem>>, vector<1x8xf32>
    %96 = arith.mulf %95, %94 : vector<1x8xf32>
    %c0_85 = arith.constant 0 : index
    %c0_86 = arith.constant 0 : index
    %97 = vector.load %arg8[%c0_85, %c0_86] : memref<1x8xf32, #tpu.memory_space<vmem>>, vector<1x8xf32>
    %98 = arith.mulf %87, %96 : vector<1x8xf32>
    %99 = arith.subf %97, %98 : vector<1x8xf32>
    %c0_87 = arith.constant 0 : index
    %c0_88 = arith.constant 0 : index
    %100 = vector.load %arg10[%c0_87, %c0_88] : memref<8x128xf32, #tpu.memory_space<vmem>>, vector<8x128xf32>
    %cst_89 = arith.constant dense<0.000000e+00> : vector<1x128xf32>
    %101 = tpu.matmul %96, %100, %cst_89 {dimension_numbers = #tpu.dot_dimension_numbers<[1], [0], [0], [1], [0, 0, 1, 1], [], []>} : vector<1x8xf32>, vector<8x128xf32>, vector<1x128xf32> -> vector<1x128xf32>
    %c0_90 = arith.constant 0 : index
    %c0_91 = arith.constant 0 : index
    %102 = vector.load %arg10[%c0_90, %c0_91] : memref<8x128xf32, #tpu.memory_space<vmem>>, vector<8x128xf32>
    %cst_92 = arith.constant dense<0.000000e+00> : vector<1x128xf32>
    %103 = tpu.matmul %99, %102, %cst_92 {dimension_numbers = #tpu.dot_dimension_numbers<[1], [0], [0], [1], [0, 0, 1, 1], [], []>} : vector<1x8xf32>, vector<8x128xf32>, vector<1x128xf32> -> vector<1x128xf32>
    %104 = vector.broadcast %101 : vector<1x128xf32> to vector<32x128xf32>
    %105 = arith.mulf %76, %104 : vector<32x128xf32>
    %106 = vector.broadcast %103 : vector<1x128xf32> to vector<32x128xf32>
    %107 = arith.addf %105, %106 : vector<32x128xf32>
    %cst_93 = arith.constant 5.000000e-01 : f32
    %108 = vector.broadcast %cst_93 : f32 to vector<32x128xf32>
    %109 = arith.mulf %108, %3 : vector<32x128xf32>
    %110 = arith.addf %107, %109 : vector<32x128xf32>
    %cst_94 = arith.constant 0.000000e+00 : f32
    %111 = vector.broadcast %cst_94 : f32 to vector<32x128xf32>
    %112 = arith.maximumf %110, %111 : vector<32x128xf32>
    %c0_95 = arith.constant 0 : index
    %c0_96 = arith.constant 0 : index
    %113 = vector.load %arg11[%c0_95, %c0_96] : memref<32x128xf32, #tpu.memory_space<vmem>>, vector<32x128xf32>
    tpu.vector_store %arg11[%c0_95, %c0_96], %112 {strides = array<i32>} : memref<32x128xf32, #tpu.memory_space<vmem>>, vector<32x128xf32>,
    return
  }
}

</mosaic_0001>

<llo_original>
// kernel: tile.17
$region0: #{tile.17}
  %s0 = inlined_call_operand.vmem [shape: f32[16,8,8], index: 0, kind: input, shape index: {}]
  %s1 = inlined_call_operand.vmem [shape: f32[128,8], index: 1, kind: output, shape index: {}]
  %s2 = smov 3
  %v3 = vld [vmem:[%s0] ss:$16 sm:%s2]
  %s4 = smov 12
  %v5 = vld [vmem:[%s0] ss:$16 sm:%s4]
  %vm6 = vcmask 1043458
  %v7 = vsel %vm6, %v5, %v3
  %s8 = smov 48
  %v9 = vld [vmem:[%s0] ss:$16 sm:%s8]
  %vm10 = vcmask 1045508
  %v11 = vsel %vm10, %v9, %v7
  %s12 = smov 192
  %v13 = vld [vmem:[%s0] ss:$16 sm:%s12]
  %vm14 = vcmask 1047558
  %v15 = vsel %vm14, %v13, %v11
  %vm16 = vcmask 64512
  %17 = vst.msk [vmem:[%s1] sm:$0xff] %vm16, %v15
  %s18 = scalar_lea.vmem %s0, 15
  %s19 = smov 3
  %v20 = vld [vmem:[%s18] ss:$16 sm:%s19]
  %s21 = scalar_lea.vmem %s0, 15
  %s22 = smov 12
  %v23 = vld [vmem:[%s21] ss:$16 sm:%s22]
  %vm24 = vcmask 1043458
  %v25 = vsel %vm24, %v23, %v20
  %s26 = scalar_lea.vmem %s0, 15
  %s27 = smov 48
  %v28 = vld [vmem:[%s26] ss:$16 sm:%s27]
  %vm29 = vcmask 1045508
  %v30 = vsel %vm29, %v28, %v25
  %s31 = scalar_lea.vmem %s0, 15
  %s32 = smov 192
  %v33 = vld [vmem:[%s31] ss:$16 sm:%s32]
  %vm34 = vcmask 1047558
  %v35 = vsel %vm34, %v33, %v30
  %36 = vrot.lane.b32.xlu0 %v35, 120
  %v37 = vpop.permute.xlu0 %36
  %vm38 = vcmask 1048512
  %39 = vst.msk [vmem:[%s1] sm:$0xff] %vm38, %v37
  %s40 = scalar_lea.vmem %s0, 14
  %s41 = smov 3
  %v42 = vld [vmem:[%s40] ss:$16 sm:%s41]
  %s43 = scalar_lea.vmem %s0, 14
  %s44 = smov 12
  %v45 = vld [vmem:[%s43] ss:$16 sm:%s44]
  %vm46 = vcmask 1043458
  %v47 = vsel %vm46, %v45, %v42
  %s48 = scalar_lea.vmem %s0, 14
  %s49 = smov 48
  %v50 = vld [vmem:[%s48] ss:$16 sm:%s49]
  %vm51 = vcmask 1045508
  %v52 = vsel %vm51, %v50, %v47
  %s53 = scalar_lea.vmem %s0, 14
  %s54 = smov 192
  %v55 = vld [vmem:[%s53] ss:$16 sm:%s54]
  %vm56 = vcmask 1047558
  %v57 = vsel %vm56, %v55, %v52
  %58 = vrot.lane.b32.xlu0 %v57, 112
  %v59 = vpop.permute.xlu0 %58
  %vm60 = vcmask 982912
  %61 = vst.msk [vmem:[%s1] sm:$0xff] %vm60, %v59
  %s62 = scalar_lea.vmem %s0, 13
  %s63 = smov 3
  %v64 = vld [vmem:[%s62] ss:$16 sm:%s63]
  %s65 = scalar_lea.vmem %s0, 13
  %s66 = smov 12
  %v67 = vld [vmem:[%s65] ss:$16 sm:%s66]
  %vm68 = vcmask 1043458
  %v69 = vsel %vm68, %v67, %v64
  %s70 = scalar_lea.vmem %s0, 13
  %s71 = smov 48
  %v72 = vld [vmem:[%s70] ss:$16 sm:%s71]
  %vm73 = vcmask 1045508
  %v74 = vsel %vm73, %v72, %v69
  %s75 = scalar_lea.vmem %s0, 13
  %s76 = smov 192
  %v77 = vld [vmem:[%s75] ss:$16 sm:%s76]
  %vm78 = vcmask 1047558
  %v79 = vsel %vm78, %v77, %v74
  %80 = vrot.lane.b32.xlu0 %v79, 104
  %v81 = vpop.permute.xlu0 %80
  %vm82 = vcmask 917312
  %83 = vst.msk [vmem:[%s1] sm:$0xff] %vm82, %v81
  %s84 = scalar_lea.vmem %s0, 12
  %s85 = smov 3
  %v86 = vld [vmem:[%s84] ss:$16 sm:%s85]
  %s87 = scalar_lea.vmem %s0, 12
  %s88 = smov 12
  %v89 = vld [vmem:[%s87] ss:$16 sm:%s88]
  %vm90 = vcmask 1043458
  %v91 = vsel %vm90, %v89, %v86
  %s92 = scalar_lea.vmem %s0, 12
  %s93 = smov 48
  %v94 = vld [vmem:[%s92] ss:$16 sm:%s93]
  %vm95 = vcmask 1045508
  %v96 = vsel %vm95, %v94, %v91
  %s97 = scalar_lea.vmem %s0, 12
  %s98 = smov 192
  %v99 = vld [vmem:[%s97] ss:$16 sm:%s98]
  %vm100 = vcmask 1047558
  %v101 = vsel %vm100, %v99, %v96
  %102 = vrot.lane.b32.xlu0 %v101, 96
  %v103 = vpop.permute.xlu0 %102
  %vm104 = vcmask 851712
  %105 = vst.msk [vmem:[%s1] sm:$0xff] %vm104, %v103
  %s106 = scalar_lea.vmem %s0, 11
  %s107 = smov 3
  %v108 = vld [vmem:[%s106] ss:$16 sm:%s107]
  %s109 = scalar_lea.vmem %s0, 11
  %s110 = smov 12
  %v111 = vld [vmem:[%s109] ss:$16 sm:%s110]
  %vm112 = vcmask 1043458
  %v113 = vsel %vm112, %v111, %v108
  %s114 = scalar_lea.vmem %s0, 11
  %s115 = smov 48
  %v116 = vld [vmem:[%s114] ss:$16 sm:%s115]
  %vm117 = vcmask 1045508
  %v118 = vsel %vm117, %v116, %v113
  %s119 = scalar_lea.vmem %s0, 11
  %s120 = smov 192
  %v121 = vld [vmem:[%s119] ss:$16 sm:%s120]
  %vm122 = vcmask 1047558
  %v123 = vsel %vm122, %v121, %v118
  %124 = vrot.lane.b32.xlu0 %v123, 88
  %v125 = vpop.permute.xlu0 %124
  %vm126 = vcmask 786112
  %127 = vst.msk [vmem:[%s1] sm:$0xff] %vm126, %v125
  %s128 = scalar_lea.vmem %s0, 10
  %s129 = smov 3
  %v130 = vld [vmem:[%s128] ss:$16 sm:%s129]
  %s131 = scalar_lea.vmem %s0, 10
  %s132 = smov 12
  %v133 = vld [vmem:[%s131] ss:$16 sm:%s132]
  %vm134 = vcmask 1043458
  %v135 = vsel %vm134, %v133, %v130
  %s136 = scalar_lea.vmem %s0, 10
  %s137 = smov 48
  %v138 = vld [vmem:[%s136] ss:$16 sm:%s137]
  %vm139 = vcmask 1045508
  %v140 = vsel %vm139, %v138, %v135
  %s141 = scalar_lea.vmem %s0, 10
  %s142 = smov 192
  %v143 = vld [vmem:[%s141] ss:$16 sm:%s142]
  %vm144 = vcmask 1047558
  %v145 = vsel %vm144, %v143, %v140
  %146 = vrot.lane.b32.xlu0 %v145, 80
  %v147 = vpop.permute.xlu0 %146
  %vm148 = vcmask 720512
  %149 = vst.msk [vmem:[%s1] sm:$0xff] %vm148, %v147
  %s150 = scalar_lea.vmem %s0, 9
  %s151 = smov 3
  %v152 = vld [vmem:[%s150] ss:$16 sm:%s151]
  %s153 = scalar_lea.vmem %s0, 9
  %s154 = smov 12
  %v155 = vld [vmem:[%s153] ss:$16 sm:%s154]
  %vm156 = vcmask 1043458
  %v157 = vsel %vm156, %v155, %v152
  %s158 = scalar_lea.vmem %s0, 9
  %s159 = smov 48
  %v160 = vld [vmem:[%s158] ss:$16 sm:%s159]
  %vm161 = vcmask 1045508
  %v162 = vsel %vm161, %v160, %v157
  %s163 = scalar_lea.vmem %s0, 9
  %s164 = smov 192
  %v165 = vld [vmem:[%s163] ss:$16 sm:%s164]
  %vm166 = vcmask 1047558
  %v167 = vsel %vm166, %v165, %v162
  %168 = vrot.lane.b32.xlu0 %v167, 72
  %v169 = vpop.permute.xlu0 %168
  %vm170 = vcmask 654912
  %171 = vst.msk [vmem:[%s1] sm:$0xff] %vm170, %v169
  %s172 = scalar_lea.vmem %s0, 8
  %s173 = smov 3
  %v174 = vld [vmem:[%s172] ss:$16 sm:%s173]
  %s175 = scalar_lea.vmem %s0, 8
  %s176 = smov 12
  %v177 = vld [vmem:[%s175] ss:$16 sm:%s176]
  %vm178 = vcmask 1043458
  %v179 = vsel %vm178, %v177, %v174
  %s180 = scalar_lea.vmem %s0, 8
  %s181 = smov 48
  %v182 = vld [vmem:[%s180] ss:$16 sm:%s181]
  %vm183 = vcmask 1045508
  %v184 = vsel %vm183, %v182, %v179
  %s185 = scalar_lea.vmem %s0, 8
  %s186 = smov 192
  %v187 = vld [vmem:[%s185] ss:$16 sm:%s186]
  %vm188 = vcmask 1047558
  %v189 = vsel %vm188, %v187, %v184
  %190 = vrot.lane.b32.xlu0 %v189, 64
  %v191 = vpop.permute.xlu0 %190
  %vm192 = vcmask 589312
  %193 = vst.msk [vmem:[%s1] sm:$0xff] %vm192, %v191
  %s194 = scalar_lea.vmem %s0, 7
  %s195 = smov 3
  %v196 = vld [vmem:[%s194] ss:$16 sm:%s195]
  %s197 = scalar_lea.vmem %s0, 7
  %s198 = smov 12
  %v199 = vld [vmem:[%s197] ss:$16 sm:%s198]
  %vm200 = vcmask 1043458
  %v201 = vsel %vm200, %v199, %v196
  %s202 = scalar_lea.vmem %s0, 7
  %s203 = smov 48
  %v204 = vld [vmem:[%s202] ss:$16 sm:%s203]
  %vm205 = vcmask 1045508
  %v206 = vsel %vm205, %v204, %v201
  %s207 = scalar_lea.vmem %s0, 7
  %s208 = smov 192
  %v209 = vld [vmem:[%s207] ss:$16 sm:%s208]
  %vm210 = vcmask 1047558
  %v211 = vsel %vm210, %v209, %v206
  %212 = vrot.lane.b32.xlu0 %v211, 56
  %v213 = vpop.permute.xlu0 %212
  %vm214 = vcmask 523712
  %215 = vst.msk [vmem:[%s1] sm:$0xff] %vm214, %v213
  %s216 = scalar_lea.vmem %s0, 6
  %s217 = smov 3
  %v218 = vld [vmem:[%s216] ss:$16 sm:%s217]
  %s219 = scalar_lea.vmem %s0, 6
  %s220 = smov 12
  %v221 = vld [vmem:[%s219] ss:$16 sm:%s220]
  %vm222 = vcmask 1043458
  %v223 = vsel %vm222, %v221, %v218
  %s224 = scalar_lea.vmem %s0, 6
  %s225 = smov 48
  %v226 = vld [vmem:[%s224] ss:$16 sm:%s225]
  %vm227 = vcmask 1045508
  %v228 = vsel %vm227, %v226, %v223
  %s229 = scalar_lea.vmem %s0, 6
  %s230 = smov 192
  %v231 = vld [vmem:[%s229] ss:$16 sm:%s230]
  %vm232 = vcmask 1047558
  %v233 = vsel %vm232, %v231, %v228
  %234 = vrot.lane.b32.xlu0 %v233, 48
  %v235 = vpop.permute.xlu0 %234
  %vm236 = vcmask 458112
  %237 = vst.msk [vmem:[%s1] sm:$0xff] %vm236, %v235
  %s238 = scalar_lea.vmem %s0, 5
  %s239 = smov 3
  %v240 = vld [vmem:[%s238] ss:$16 sm:%s239]
  %s241 = scalar_lea.vmem %s0, 5
  %s242 = smov 12
  %v243 = vld [vmem:[%s241] ss:$16 sm:%s242]
  %vm244 = vcmask 1043458
  %v245 = vsel %vm244, %v243, %v240
  %s246 = scalar_lea.vmem %s0, 5
  %s247 = smov 48
  %v248 = vld [vmem:[%s246] ss:$16 sm:%s247]
  %vm249 = vcmask 1045508
  %v250 = vsel %vm249, %v248, %v245
  %s251 = scalar_lea.vmem %s0, 5
  %s252 = smov 192
  %v253 = vld [vmem:[%s251] ss:$16 sm:%s252]
  %vm254 = vcmask 1047558
  %v255 = vsel %vm254, %v253, %v250
  %256 = vrot.lane.b32.xlu0 %v255, 40
  %v257 = vpop.permute.xlu0 %256
  %vm258 = vcmask 392512
  %259 = vst.msk [vmem:[%s1] sm:$0xff] %vm258, %v257
  %s260 = scalar_lea.vmem %s0, 4
  %s261 = smov 3
  %v262 = vld [vmem:[%s260] ss:$16 sm:%s261]
  %s263 = scalar_lea.vmem %s0, 4
  %s264 = smov 12
  %v265 = vld [vmem:[%s263] ss:$16 sm:%s264]
  %vm266 = vcmask 1043458
  %v267 = vsel %vm266, %v265, %v262
  %s268 = scalar_lea.vmem %s0, 4
  %s269 = smov 48
  %v270 = vld [vmem:[%s268] ss:$16 sm:%s269]
  %vm271 = vcmask 1045508
  %v272 = vsel %vm271, %v270, %v267
  %s273 = scalar_lea.vmem %s0, 4
  %s274 = smov 192
  %v275 = vld [vmem:[%s273] ss:$16 sm:%s274]
  %vm276 = vcmask 1047558
  %v277 = vsel %vm276, %v275, %v272
  %278 = vrot.lane.b32.xlu0 %v277, 32
  %v279 = vpop.permute.xlu0 %278
  %vm280 = vcmask 326912
  %281 = vst.msk [vmem:[%s1] sm:$0xff] %vm280, %v279
  %s282 = scalar_lea.vmem %s0, 3
  %s283 = smov 3
  %v284 = vld [vmem:[%s282] ss:$16 sm:%s283]
  %s285 = scalar_lea.vmem %s0, 3
  %s286 = smov 12
  %v287 = vld [vmem:[%s285] ss:$16 sm:%s286]
  %vm288 = vcmask 1043458
  %v289 = vsel %vm288, %v287, %v284
  %s290 = scalar_lea.vmem %s0, 3
  %s291 = smov 48
  %v292 = vld [vmem:[%s290] ss:$16 sm:%s291]
  %vm293 = vcmask 1045508
  %v294 = vsel %vm293, %v292, %v289
  %s295 = scalar_lea.vmem %s0, 3
  %s296 = smov 192
  %v297 = vld [vmem:[%s295] ss:$16 sm:%s296]
  %vm298 = vcmask 1047558
  %v299 = vsel %vm298, %v297, %v294
  %300 = vrot.lane.b32.xlu0 %v299, 24
  %v301 = vpop.permute.xlu0 %300
  %vm302 = vcmask 261312
  %303 = vst.msk [vmem:[%s1] sm:$0xff] %vm302, %v301
  %s304 = scalar_lea.vmem %s0, 2
  %s305 = smov 3
  %v306 = vld [vmem:[%s304] ss:$16 sm:%s305]
  %s307 = scalar_lea.vmem %s0, 2
  %s308 = smov 12
  %v309 = vld [vmem:[%s307] ss:$16 sm:%s308]
  %vm310 = vcmask 1043458
  %v311 = vsel %vm310, %v309, %v306
  %s312 = scalar_lea.vmem %s0, 2
  %s313 = smov 48
  %v314 = vld [vmem:[%s312] ss:$16 sm:%s313]
  %vm315 = vcmask 1045508
  %v316 = vsel %vm315, %v314, %v311
  %s317 = scalar_lea.vmem %s0, 2
  %s318 = smov 192
  %v319 = vld [vmem:[%s317] ss:$16 sm:%s318]
  %vm320 = vcmask 1047558
  %v321 = vsel %vm320, %v319, %v316
  %322 = vrot.lane.b32.xlu0 %v321, 16
  %v323 = vpop.permute.xlu0 %322
  %vm324 = vcmask 195712
  %325 = vst.msk [vmem:[%s1] sm:$0xff] %vm324, %v323
  %s326 = scalar_lea.vmem %s0, 1
  %s327 = smov 3
  %v328 = vld [vmem:[%s326] ss:$16 sm:%s327]
  %s329 = scalar_lea.vmem %s0, 1
  %s330 = smov 12
  %v331 = vld [vmem:[%s329] ss:$16 sm:%s330]
  %vm332 = vcmask 1043458
  %v333 = vsel %vm332, %v331, %v328
  %s334 = scalar_lea.vmem %s0, 1
  %s335 = smov 48
  %v336 = vld [vmem:[%s334] ss:$16 sm:%s335]
  %vm337 = vcmask 1045508
  %v338 = vsel %vm337, %v336, %v333
  %s339 = scalar_lea.vmem %s0, 1
  %s340 = smov 192
  %v341 = vld [vmem:[%s339] ss:$16 sm:%s340]
  %vm342 = vcmask 1047558
  %v343 = vsel %vm342, %v341, %v338
  %344 = vrot.lane.b32.xlu0 %v343, 8
  %v345 = vpop.permute.xlu0 %344
  %vm346 = vcmask 130112
  %347 = vst.msk [vmem:[%s1] sm:$0xff] %vm346, %v345

// kernel: resnet_block.1
$region0: #{resnet_block.1}
  #allocation0 [shape = 'u32[]', space=smem, size = 0x4, offset = 0x4, fixed_abs, tag = 'smem constant byte address 0x4 - core index']
  #allocation1 [shape = 'u32[144,128]{1,0:T(1,128)}', space=vmem, size = 0x12000, scoped, tag = 'internal scratch']
  #allocation2 [shape = 'f32[2,18,128]{2,1,0:T(8,128)}', space=vmem, size = 0x6000, scoped, tag = 'scratch operand']
  %s0 = inlined_call_operand.vmem [shape: f32[32,128], index: 0, kind: input, shape index: {}]
  %s1 = inlined_call_operand.vmem [shape: f32[3,128,128], index: 1, kind: input, shape index: {}]
  %s2 = inlined_call_operand.vmem [shape: f32[1,128], index: 2, kind: input, shape index: {}]
  %s3 = inlined_call_operand.vmem [shape: f32[1,8], index: 3, kind: input, shape index: {}]
  %s4 = inlined_call_operand.vmem [shape: f32[1,8], index: 4, kind: input, shape index: {}]
  %s5 = inlined_call_operand.vmem [shape: f32[3,128,128], index: 5, kind: input, shape index: {}]
  %s6 = inlined_call_operand.vmem [shape: f32[1,128], index: 6, kind: input, shape index: {}]
  %s7 = inlined_call_operand.vmem [shape: f32[1,8], index: 7, kind: input, shape index: {}]
  %s8 = inlined_call_operand.vmem [shape: f32[1,8], index: 8, kind: input, shape index: {}]
  %s9 = inlined_call_operand.vmem [shape: f32[128,8], index: 9, kind: input, shape index: {}]
  %s10 = inlined_call_operand.vmem [shape: f32[8,128], index: 10, kind: input, shape index: {}]
  %s11 = inlined_call_operand.vmem [shape: f32[32,128], index: 11, kind: output, shape index: {}]
  %s12 = sld [smem:[#allocation0]]
  $region54: #{resnet_block.1} parent=0
    _
  %s14 = ssub.s32 1, %s12
  %s15 = scalar_select 0, %s14, %s12
  // Predicated region
  $region2: #{resnet_block.1} parent=0 // pred_check
    _
  $region3: #{resnet_block.1} parent=0 // pred_check_branch
    %17 = sbr.rel (0) target = $region5
  $region4: #{resnet_block.1} parent=0 // pred_region
    _
  $region5: #{resnet_block.1} parent=0 // pred_fallthru
    _
  // Predicated region
  $region6: #{resnet_block.1} parent=0 // pred_check
    _
  $region7: #{resnet_block.1} parent=0 // pred_check_branch
    %19 = sbr.rel (0) target = $region9
  $region8: #{resnet_block.1} parent=0 // pred_region
    _
  $region9: #{resnet_block.1} parent=0 // pred_fallthru
    _
  // Predicated region
  $region10: #{resnet_block.1} parent=0 // pred_check
    _
  $region11: #{resnet_block.1} parent=0 // pred_check_branch
    %21 = sbr.rel (0) target = $region13
  $region12: #{resnet_block.1} parent=0 // pred_region
    _
  $region13: #{resnet_block.1} parent=0 // pred_fallthru
    _
  // Predicated region
  $region14: #{resnet_block.1} parent=0 // pred_check
    _
  $region15: #{resnet_block.1} parent=0 // pred_check_branch
    %23 = sbr.rel (0) target = $region17
  $region16: #{resnet_block.1} parent=0 // pred_region
    _
  $region17: #{resnet_block.1} parent=0 // pred_fallthru
    _
  // Predicated region
  $region18: #{resnet_block.1} parent=0 // pred_check
    _
  $region19: #{resnet_block.1} parent=0 // pred_check_branch
    %25 = sbr.rel (0) target = $region21
  $region20: #{resnet_block.1} parent=0 // pred_region
    _
  $region21: #{resnet_block.1} parent=0 // pred_fallthru
    _
  // Predicated region
  $region22: #{resnet_block.1} parent=0 // pred_check
    _
  $region23: #{resnet_block.1} parent=0 // pred_check_branch
    %27 = sbr.rel (0) target = $region25
  $region24: #{resnet_block.1} parent=0 // pred_region
    _
  $region25: #{resnet_block.1} parent=0 // pred_fallthru
    _
  // Predicated region
  $region26: #{resnet_block.1} parent=0 // pred_check
    _
  $region27: #{resnet_block.1} parent=0 // pred_check_branch
    %29 = sbr.rel (0) target = $region29
  $region28: #{resnet_block.1} parent=0 // pred_region
    _
  $region29: #{resnet_block.1} parent=0 // pred_fallthru
    _
  // Predicated region
  $region30: #{resnet_block.1} parent=0 // pred_check
    _
  $region31: #{resnet_block.1} parent=0 // pred_check_branch
    %31 = sbr.rel (0) target = $region33
  $region32: #{resnet_block.1} parent=0 // pred_region
    _
  $region33: #{resnet_block.1} parent=0 // pred_fallthru
    _
  // Predicated region
  $region34: #{resnet_block.1} parent=0 // pred_check
    _
  $region35: #{resnet_block.1} parent=0 // pred_check_branch
    %33 = sbr.rel (0) target = $region37
  $region36: #{resnet_block.1} parent=0 // pred_region
    _
  $region37: #{resnet_block.1} parent=0 // pred_fallthru
    _
  // Predicated region
  $region38: #{resnet_block.1} parent=0 // pred_check
    _
  $region39: #{resnet_block.1} parent=0 // pred_check_branch
    %35 = sbr.rel (0) target = $region41
  $region40: #{resnet_block.1} parent=0 // pred_region
    _
  $region41: #{resnet_block.1} parent=0 // pred_fallthru
    _
  // Predicated region
  $region42: #{resnet_block.1} parent=0 // pred_check
    _
  $region43: #{resnet_block.1} parent=0 // pred_check_branch
    %37 = sbr.rel (0) target = $region45
  $region44: #{resnet_block.1} parent=0 // pred_region
    _
  $region45: #{resnet_block.1} parent=0 // pred_fallthru
    _
  %38 = vst [vmem:[#allocation2] sm:$0x1] 0.0
  %39 = vst [vmem:[#allocation2 + $0x18] sm:$0x1] 0.0
  %40 = vst [vmem:[#allocation2 + $0x11] sm:$0x1] 0.0
  %41 = vst [vmem:[#allocation2 + $0x29] sm:$0x1] 0.0
  %v42 = vld [vmem:[%s0] sm:$0xff]
  %v43 = vld [vmem:[%s0 + $0x8] sm:$0xff]
  %v44 = vld [vmem:[%s0 + $0x10] sm:$0xff]
  %v45 = vld [vmem:[%s0 + $0x18] sm:$0xff]
  %46 = vst [vmem:[#allocation2 + $0x1] sm:$0xff] %v42
  %47 = vst [vmem:[#allocation2 + $0x9] sm:$0xff] %v43
  %48 = vst [vmem:[#allocation2 + $0x19] sm:$0xff] %v44
  %49 = vst [vmem:[#allocation2 + $0x21] sm:$0xff] %v45
  %s50 = scalar_lea.vmem %s1, 128
  %v51 = vld [vmem:[%s50] sm:$0xff]
  %v52 = vld [vmem:[%s50 + $0x8] sm:$0xff]
  %v53 = vld [vmem:[%s50 + $0x10] sm:$0xff]
  %v54 = vld [vmem:[%s50 + $0x18] sm:$0xff]
  %v55 = vld [vmem:[%s50 + $0x20] sm:$0xff]
  %v56 = vld [vmem:[%s50 + $0x28] sm:$0xff]
  %v57 = vld [vmem:[%s50 + $0x30] sm:$0xff]
  %v58 = vld [vmem:[%s50 + $0x38] sm:$0xff]
  %v59 = vld [vmem:[%s50 + $0x40] sm:$0xff]
  %v60 = vld [vmem:[%s50 + $0x48] sm:$0xff]
  %v61 = vld [vmem:[%s50 + $0x50] sm:$0xff]
  %v62 = vld [vmem:[%s50 + $0x58] sm:$0xff]
  %v63 = vld [vmem:[%s50 + $0x60] sm:$0xff]
  %v64 = vld [vmem:[%s50 + $0x68] sm:$0xff]
  %v65 = vld [vmem:[%s50 + $0x70] sm:$0xff]
  %v66 = vld [vmem:[%s50 + $0x78] sm:$0xff]
  %v67 = vld [vmem:[#allocation2] sm:$0xff]
  %v68 = vld [vmem:[#allocation2 + $0x8] sm:$0xff]
  %v69 = vld [vmem:[#allocation2 + $0x18] sm:$0xff]
  %v70 = vld [vmem:[#allocation2 + $0x20] sm:$0xff]
  %v71 = vld [vmem:[%s1] sm:$0xff]
  %v72 = vld [vmem:[%s1 + $0x8] sm:$0xff]
  %v73 = vld [vmem:[%s1 + $0x10] sm:$0xff]
  %v74 = vld [vmem:[%s1 + $0x18] sm:$0xff]
  %v75 = vld [vmem:[%s1 + $0x20] sm:$0xff]
  %v76 = vld [vmem:[%s1 + $0x28] sm:$0xff]
  %v77 = vld [vmem:[%s1 + $0x30] sm:$0xff]
  %v78 = vld [vmem:[%s1 + $0x38] sm:$0xff]
  %v79 = vld [vmem:[%s1 + $0x40] sm:$0xff]
  %v80 = vld [vmem:[%s1 + $0x48] sm:$0xff]
  %v81 = vld [vmem:[%s1 + $0x50] sm:$0xff]
  %v82 = vld [vmem:[%s1 + $0x58] sm:$0xff]
  %v83 = vld [vmem:[%s1 + $0x60] sm:$0xff]
  %v84 = vld [vmem:[%s1 + $0x68] sm:$0xff]
  %v85 = vld [vmem:[%s1 + $0x70] sm:$0xff]
  %v86 = vld [vmem:[%s1 + $0x78] sm:$0xff]
  %87 = vmatprep.subr.mxu0 0.0
  %88 = vmatpush1.msra.mxu0 %v71
  %89 = vmatprep.subr.mxu0 0.0
  %90 = vmatpush1.msra.mxu0 %v72
  %91 = vmatprep.subr.mxu0 0.0
  %92 = vmatpush1.msra.mxu0 %v73
  %93 = vmatprep.subr.mxu0 0.0
  %94 = vmatpush1.msra.mxu0 %v74
  %95 = vmatprep.subr.mxu0 0.0
  %96 = vmatpush1.msra.mxu0 %v75
  %97 = vmatprep.subr.mxu0 0.0
  %98 = vmatpush1.msra.mxu0 %v76
  %99 = vmatprep.subr.mxu0 0.0
  %100 = vmatpush1.msra.mxu0 %v77
  %101 = vmatprep.subr.mxu0 0.0
  %102 = vmatpush1.msra.mxu0 %v78
  %103 = vmatprep.subr.mxu0 0.0
  %104 = vmatpush1.msra.mxu0 %v79
  %105 = vmatprep.subr.mxu0 0.0
  %106 = vmatpush1.msra.mxu0 %v80
  %107 = vmatprep.subr.mxu0 0.0
  %108 = vmatpush1.msra.mxu0 %v81
  %109 = vmatprep.subr.mxu0 0.0
  %110 = vmatpush1.msra.mxu0 %v82
  %111 = vmatprep.subr.mxu0 0.0
  %112 = vmatpush1.msra.mxu0 %v83
  %113 = vmatprep.subr.mxu0 0.0
  %114 = vmatpush1.msra.mxu0 %v84
  %115 = vmatprep.subr.mxu0 0.0
  %116 = vmatpush1.msra.mxu0 %v85
  %117 = vmatprep.subr.mxu0 0.0
  %118 = vmatpush1.msra.mxu0 %v86
  %119 = vmatprep.subr.mxu0 0.0
  %120 = vmatpush1.msra.mxu0 0.0
  %121 = vmatprep.subr.mxu0 0.0
  %122 = vmatpush1.msra.mxu0 0.0
  %123 = vmatprep.subr.mxu0 0.0
  %124 = vmatpush1.msra.mxu0 0.0
  %125 = vmatprep.subr.mxu0 0.0
  %126 = vmatpush1.msra.mxu0 0.0
  %127 = vmatprep.subr.mxu0 0.0
  %128 = vmatpush1.msra.mxu0 0.0
  %129 = vmatprep.subr.mxu0 0.0
  %130 = vmatpush1.msra.mxu0 0.0
  %131 = vmatprep.subr.mxu0 0.0
  %132 = vmatpush1.msra.mxu0 0.0
  %133 = vmatprep.subr.mxu0 0.0
  %134 = vmatpush1.msra.mxu0 0.0
  %135 = vmatprep.subr.mxu0 0.0
  %136 = vmatpush1.msra.mxu0 0.0
  %137 = vmatprep.subr.mxu0 0.0
  %138 = vmatpush1.msra.mxu0 0.0
  %139 = vmatprep.subr.mxu0 0.0
  %140 = vmatpush1.msra.mxu0 0.0
  %141 = vmatprep.subr.mxu0 0.0
  %142 = vmatpush1.msra.mxu0 0.0
  %143 = vmatprep.subr.mxu0 0.0
  %144 = vmatpush1.msra.mxu0 0.0
  %145 = vmatprep.subr.mxu0 0.0
  %146 = vmatpush1.msra.mxu0 0.0
  %147 = vmatprep.subr.mxu0 0.0
  %148 = vmatpush1.msra.mxu0 0.0
  %149 = vmatprep.subr.mxu0 0.0
  %150 = vmatpush1.msra.mxu0 0.0
  %151 = vmatprep.mubr.f32.mxu0 0.0
  %152 = vmatmul.mubr.f32.gmra.mrb[0].mxu0 %v67
  %v153 = vpop.f32.mrb[0].mxu0
  %v154 = vadd.f32 0.0, %v153
  %v155 = vpop.f32.mrb[0].mxu0
  %156 = vmatprep.mubr.f32.mxu0 0.0
  %157 = vmatmul.mubr.f32.gmra.mrb[0].mxu0 %v68
  %v158 = vpop.f32.mrb[0].mxu0
  %v159 = vadd.f32 0.0, %v158
  %v160 = vpop.f32.mrb[0].mxu0
  %161 = vmatprep.mubr.f32.mxu0 0.0
  %162 = vmatmul.mubr.f32.gmra.mrb[0].mxu0 %v69
  %v163 = vpop.f32.mrb[0].mxu0
  %v164 = vadd.f32 0.0, %v163
  %v165 = vpop.f32.mrb[0].mxu0
  %166 = vmatprep.mubr.f32.mxu0 0.0
  %167 = vmatmul.mubr.f32.gmra.mrb[0].mxu0 %v70
  %v168 = vpop.f32.mrb[0].mxu0
  %v169 = vadd.f32 0.0, %v168
  %v170 = vpop.f32.mrb[0].mxu0
  %171 = vdwg.mxu0
  %172 = vmatprep.subr.mxu0 0.0
  %173 = vmatpush1.msra.mxu0 %v51
  %174 = vmatprep.subr.mxu0 0.0
  %175 = vmatpush1.msra.mxu0 %v52
  %176 = vmatprep.subr.mxu0 0.0
  %177 = vmatpush1.msra.mxu0 %v53
  %178 = vmatprep.subr.mxu0 0.0
  %179 = vmatpush1.msra.mxu0 %v54
  %180 = vmatprep.subr.mxu0 0.0
  %181 = vmatpush1.msra.mxu0 %v55
  %182 = vmatprep.subr.mxu0 0.0
  %183 = vmatpush1.msra.mxu0 %v56
  %184 = vmatprep.subr.mxu0 0.0
  %185 = vmatpush1.msra.mxu0 %v57
  %186 = vmatprep.subr.mxu0 0.0
  %187 = vmatpush1.msra.mxu0 %v58
  %188 = vmatprep.subr.mxu0 0.0
  %189 = vmatpush1.msra.mxu0 %v59
  %190 = vmatprep.subr.mxu0 0.0
  %191 = vmatpush1.msra.mxu0 %v60
  %192 = vmatprep.subr.mxu0 0.0
  %193 = vmatpush1.msra.mxu0 %v61
  %194 = vmatprep.subr.mxu0 0.0
  %195 = vmatpush1.msra.mxu0 %v62
  %196 = vmatprep.subr.mxu0 0.0
  %197 = vmatpush1.msra.mxu0 %v63
  %198 = vmatprep.subr.mxu0 0.0
  %199 = vmatpush1.msra.mxu0 %v64
  %200 = vmatprep.subr.mxu0 0.0
  %201 = vmatpush1.msra.mxu0 %v65
  %202 = vmatprep.subr.mxu0 0.0
  %203 = vmatpush1.msra.mxu0 %v66
  %204 = vmatprep.subr.mxu0 0.0
  %205 = vmatpush1.msra.mxu0 0.0
  %206 = vmatprep.subr.mxu0 0.0
  %207 = vmatpush1.msra.mxu0 0.0
  %208 = vmatprep.subr.mxu0 0.0
  %209 = vmatpush1.msra.mxu0 0.0
  %210 = vmatprep.subr.mxu0 0.0
  %211 = vmatpush1.msra.mxu0 0.0
  %212 = vmatprep.subr.mxu0 0.0
  %213 = vmatpush1.msra.mxu0 0.0
  %214 = vmatprep.subr.mxu0 0.0
  %215 = vmatpush1.msra.mxu0 0.0
  %216 = vmatprep.subr.mxu0 0.0
  %217 = vmatpush1.msra.mxu0 0.0
  %218 = vmatprep.subr.mxu0 0.0
  %219 = vmatpush1.msra.mxu0 0.0
  %220 = vmatprep.subr.mxu0 0.0
  %221 = vmatpush1.msra.mxu0 0.0
  %222 = vmatprep.subr.mxu0 0.0
  %223 = vmatpush1.msra.mxu0 0.0
  %224 = vmatprep.subr.mxu0 0.0
  %225 = vmatpush1.msra.mxu0 0.0
  %226 = vmatprep.subr.mxu0 0.0
  %227 = vmatpush1.msra.mxu0 0.0
  %228 = vmatprep.subr.mxu0 0.0
  %229 = vmatpush1.msra.mxu0 0.0
  %230 = vmatprep.subr.mxu0 0.0
  %231 = vmatpush1.msra.mxu0 0.0
  %232 = vmatprep.subr.mxu0 0.0
  %233 = vmatpush1.msra.mxu0 0.0
  %234 = vmatprep.subr.mxu0 0.0
  %235 = vmatpush1.msra.mxu0 0.0
  %236 = vmatprep.mubr.f32.mxu0 0.0
  %237 = vmatmul.mubr.f32.gmra.mrb[0].mxu0 %v42
  %v238 = vpop.f32.mrb[0].mxu0
  %v239 = vadd.f32 %v154, %v238
  %v240 = vpop.f32.mrb[0].mxu0
  %241 = vmatprep.mubr.f32.mxu0 0.0
  %242 = vmatmul.mubr.f32.gmra.mrb[0].mxu0 %v43
  %v243 = vpop.f32.mrb[0].mxu0
  %v244 = vadd.f32 %v159, %v243
  %v245 = vpop.f32.mrb[0].mxu0
  %246 = vmatprep.mubr.f32.mxu0 0.0
  %247 = vmatmul.mubr.f32.gmra.mrb[0].mxu0 %v44
  %v248 = vpop.f32.mrb[0].mxu0
  %v249 = vadd.f32 %v164, %v248
  %v250 = vpop.f32.mrb[0].mxu0
  %251 = vmatprep.mubr.f32.mxu0 0.0
  %252 = vmatmul.mubr.f32.gmra.mrb[0].mxu0 %v45
  %v253 = vpop.f32.mrb[0].mxu0
  %v254 = vadd.f32 %v169, %v253
  %v255 = vpop.f32.mrb[0].mxu0
  %256 = vdwg.mxu0
  %v257 = vld [vmem:[#allocation2 + $0x2] sm:$0xff]
  %v258 = vld [vmem:[#allocation2 + $0xa] sm:$0xff]
  %v259 = vld [vmem:[#allocation2 + $0x1a] sm:$0xff]
  %v260 = vld [vmem:[#allocation2 + $0x22] sm:$0xff]
  %s261 = scalar_lea.vmem %s1, 256
  %v262 = vld [vmem:[%s261] sm:$0xff]
  %v263 = vld [vmem:[%s261 + $0x8] sm:$0xff]
  %v264 = vld [vmem:[%s261 + $0x10] sm:$0xff]
  %v265 = vld [vmem:[%s261 + $0x18] sm:$0xff]
  %v266 = vld [vmem:[%s261 + $0x20] sm:$0xff]
  %v267 = vld [vmem:[%s261 + $0x28] sm:$0xff]
  %v268 = vld [vmem:[%s261 + $0x30] sm:$0xff]
  %v269 = vld [vmem:[%s261 + $0x38] sm:$0xff]
  %v270 = vld [vmem:[%s261 + $0x40] sm:$0xff]
  %v271 = vld [vmem:[%s261 + $0x48] sm:$0xff]
  %v272 = vld [vmem:[%s261 + $0x50] sm:$0xff]
  %v273 = vld [vmem:[%s261 + $0x58] sm:$0xff]
  %v274 = vld [vmem:[%s261 + $0x60] sm:$0xff]
  %v275 = vld [vmem:[%s261 + $0x68] sm:$0xff]
  %v276 = vld [vmem:[%s261 + $0x70] sm:$0xff]
  %v277 = vld [vmem:[%s261 + $0x78] sm:$0xff]
  %278 = vmatprep.subr.mxu0 0.0
  %279 = vmatpush1.msra.mxu0 %v262
  %280 = vmatprep.subr.mxu0 0.0
  %281 = vmatpush1.msra.mxu0 %v263
  %282 = vmatprep.subr.mxu0 0.0
  %283 = vmatpush1.msra.mxu0 %v264
  %284 = vmatprep.subr.mxu0 0.0
  %285 = vmatpush1.msra.mxu0 %v265
  %286 = vmatprep.subr.mxu0 0.0
  %287 = vmatpush1.msra.mxu0 %v266
  %288 = vmatprep.subr.mxu0 0.0
  %289 = vmatpush1.msra.mxu0 %v267
  %290 = vmatprep.subr.mxu0 0.0
  %291 = vmatpush1.msra.mxu0 %v268
  %292 = vmatprep.subr.mxu0 0.0
  %293 = vmatpush1.msra.mxu0 %v269
  %294 = vmatprep.subr.mxu0 0.0
  %295 = vmatpush1.msra.mxu0 %v270
  %296 = vmatprep.subr.mxu0 0.0
  %297 = vmatpush1.msra.mxu0 %v271
  %298 = vmatprep.subr.mxu0 0.0
  %299 = vmatpush1.msra.mxu0 %v272
  %300 = vmatprep.subr.mxu0 0.0
  %301 = vmatpush1.msra.mxu0 %v273
  %302 = vmatprep.subr.mxu0 0.0
  %303 = vmatpush1.msra.mxu0 %v274
  %304 = vmatprep.subr.mxu0 0.0
  %305 = vmatpush1.msra.mxu0 %v275
  %306 = vmatprep.subr.mxu0 0.0
  %307 = vmatpush1.msra.mxu0 %v276
  %308 = vmatprep.subr.mxu0 0.0
  %309 = vmatpush1.msra.mxu0 %v277
  %310 = vmatprep.subr.mxu0 0.0
  %311 = vmatpush1.msra.mxu0 0.0
  %312 = vmatprep.subr.mxu0 0.0
  %313 = vmatpush1.msra.mxu0 0.0
  %314 = vmatprep.subr.mxu0 0.0
  %315 = vmatpush1.msra.mxu0 0.0
  %316 = vmatprep.subr.mxu0 0.0
  %317 = vmatpush1.msra.mxu0 0.0
  %318 = vmatprep.subr.mxu0 0.0
  %319 = vmatpush1.msra.mxu0 0.0
  %320 = vmatprep.subr.mxu0 0.0
  %321 = vmatpush1.msra.mxu0 0.0
  %322 = vmatprep.subr.mxu0 0.0
  %323 = vmatpush1.msra.mxu0 0.0
  %324 = vmatprep.subr.mxu0 0.0
  %325 = vmatpush1.msra.mxu0 0.0
  %326 = vmatprep.subr.mxu0 0.0
  %327 = vmatpush1.msra.mxu0 0.0
  %328 = vmatprep.subr.mxu0 0.0
  %329 = vmatpush1.msra.mxu0 0.0
  %330 = vmatprep.subr.mxu0 0.0
  %331 = vmatpush1.msra.mxu0 0.0
  %332 = vmatprep.subr.mxu0 0.0
  %333 = vmatpush1.msra.mxu0 0.0
  %334 = vmatprep.subr.mxu0 0.0
  %335 = vmatpush1.msra.mxu0 0.0
  %336 = vmatprep.subr.mxu0 0.0
  %337 = vmatpush1.msra.mxu0 0.0
  %338 = vmatprep.subr.mxu0 0.0
  %339 = vmatpush1.msra.mxu0 0.0
  %340 = vmatprep.subr.mxu0 0.0
  %341 = vmatpush1.msra.mxu0 0.0
  %342 = vmatprep.mubr.f32.mxu0 0.0
  %343 = vmatmul.mubr.f32.gmra.mrb[0].mxu0 %v257
  %v344 = vpop.f32.mrb[0].mxu0
  %v345 = vadd.f32 0.0, %v344
  %v346 = vpop.f32.mrb[0].mxu0
  %347 = vmatprep.mubr.f32.mxu0 0.0
  %348 = vmatmul.mubr.f32.gmra.mrb[0].mxu0 %v258
  %v349 = vpop.f32.mrb[0].mxu0
  %v350 = vadd.f32 0.0, %v349
  %v351 = vpop.f32.mrb[0].mxu0
  %352 = vmatprep.mubr.f32.mxu0 0.0
  %353 = vmatmul.mubr.f32.gmra.mrb[0].mxu0 %v259
  %v354 = vpop.f32.mrb[0].mxu0
  %v355 = vadd.f32 0.0, %v354
  %v356 = vpop.f32.mrb[0].mxu0
  %357 = vmatprep.mubr.f32.mxu0 0.0
  %358 = vmatmul.mubr.f32.gmra.mrb[0].mxu0 %v260
  %v359 = vpop.f32.mrb[0].mxu0
  %v360 = vadd.f32 0.0, %v359
  %v361 = vpop.f32.mrb[0].mxu0
  %362 = vdwg.mxu0
  %v363 = vadd.f32 %v239, %v345
  %v364 = vadd.f32 %v244, %v350
  %v365 = vadd.f32 %v249, %v355
  %v366 = vadd.f32 %v254, %v360
  %v367 = vld [vmem:[%s2] sm:$0x1]
  %v369 = vlaneseq
  %v370 = vshrl.u32 %v369, 7
  %v371 = vsub.s32 0, %v370
  %v372 = vrot.slane %v367, %v371
  %v374 = vadd.f32 %v363, %v372
  %v375 = vadd.f32 %v364, %v372
  %v376 = vadd.f32 %v365, %v372
  %v377 = vadd.f32 %v366, %v372
  %v378 = vadd.f32 %v374, %v375
  %v379 = vadd.f32 %v378, %v376
  %v380 = vadd.f32 %v379, %v377
  %v381 = vrot.slane %v380, 4
  %v382 = vadd.f32 %v380, %v381
  %v383 = vrot.slane %v382, 2
  %v384 = vadd.f32 %v382, %v383
  %v385 = vrot.slane %v384, 1
  %v386 = vadd.f32 %v384, %v385
  %v387 = vmul.f32 %v374, %v374
  %v388 = vmul.f32 %v375, %v375
  %v389 = vmul.f32 %v376, %v376
  %v390 = vmul.f32 %v377, %v377
  %v391 = vadd.f32 %v387, %v388
  %v392 = vadd.f32 %v391, %v389
  %v393 = vadd.f32 %v392, %v390
  %v394 = vrot.slane %v393, 4
  %v395 = vadd.f32 %v393, %v394
  %v396 = vrot.slane %v395, 2
  %v397 = vadd.f32 %v395, %v396
  %v398 = vrot.slane %v397, 1
  %v399 = vadd.f32 %v397, %v398
  %v400 = vld [vmem:[%s9] sm:$0xff]
  %v401 = vld [vmem:[%s9 + $0x8] sm:$0xff]
  %v402 = vld [vmem:[%s9 + $0x10] sm:$0xff]
  %v403 = vld [vmem:[%s9 + $0x18] sm:$0xff]
  %v404 = vld [vmem:[%s9 + $0x20] sm:$0xff]
  %v405 = vld [vmem:[%s9 + $0x28] sm:$0xff]
  %v406 = vld [vmem:[%s9 + $0x30] sm:$0xff]
  %v407 = vld [vmem:[%s9 + $0x38] sm:$0xff]
  %v408 = vld [vmem:[%s9 + $0x40] sm:$0xff]
  %v409 = vld [vmem:[%s9 + $0x48] sm:$0xff]
  %v410 = vld [vmem:[%s9 + $0x50] sm:$0xff]
  %v411 = vld [vmem:[%s9 + $0x58] sm:$0xff]
  %v412 = vld [vmem:[%s9 + $0x60] sm:$0xff]
  %v413 = vld [vmem:[%s9 + $0x68] sm:$0xff]
  %v414 = vld [vmem:[%s9 + $0x70] sm:$0xff]
  %v415 = vld [vmem:[%s9 + $0x78] sm:$0xff]
  %416 = vmatprep.subr.mxu0 0.0
  %417 = vmatpush1.msra.mxu0 %v400
  %418 = vmatprep.subr.mxu0 0.0
  %419 = vmatpush1.msra.mxu0 %v401
  %420 = vmatprep.subr.mxu0 0.0
  %421 = vmatpush1.msra.mxu0 %v402
  %422 = vmatprep.subr.mxu0 0.0
  %423 = vmatpush1.msra.mxu0 %v403
  %424 = vmatprep.subr.mxu0 0.0
  %425 = vmatpush1.msra.mxu0 %v404
  %426 = vmatprep.subr.mxu0 0.0
  %427 = vmatpush1.msra.mxu0 %v405
  %428 = vmatprep.subr.mxu0 0.0
  %429 = vmatpush1.msra.mxu0 %v406
  %430 = vmatprep.subr.mxu0 0.0
  %431 = vmatpush1.msra.mxu0 %v407
  %432 = vmatprep.subr.mxu0 0.0
  %433 = vmatpush1.msra.mxu0 %v408
  %434 = vmatprep.subr.mxu0 0.0
  %435 = vmatpush1.msra.mxu0 %v409
  %436 = vmatprep.subr.mxu0 0.0
  %437 = vmatpush1.msra.mxu0 %v410
  %438 = vmatprep.subr.mxu0 0.0
  %439 = vmatpush1.msra.mxu0 %v411
  %440 = vmatprep.subr.mxu0 0.0
  %441 = vmatpush1.msra.mxu0 %v412
  %442 = vmatprep.subr.mxu0 0.0
  %443 = vmatpush1.msra.mxu0 %v413
  %444 = vmatprep.subr.mxu0 0.0
  %445 = vmatpush1.msra.mxu0 %v414
  %446 = vmatprep.subr.mxu0 0.0
  %447 = vmatpush1.msra.mxu0 %v415
  %448 = vmatprep.subr.mxu0 0.0
  %449 = vmatpush1.msra.mxu0 0.0
  %450 = vmatprep.subr.mxu0 0.0
  %451 = vmatpush1.msra.mxu0 0.0
  %452 = vmatprep.subr.mxu0 0.0
  %453 = vmatpush1.msra.mxu0 0.0
  %454 = vmatprep.subr.mxu0 0.0
  %455 = vmatpush1.msra.mxu0 0.0
  %456 = vmatprep.subr.mxu0 0.0
  %457 = vmatpush1.msra.mxu0 0.0
  %458 = vmatprep.subr.mxu0 0.0
  %459 = vmatpush1.msra.mxu0 0.0
  %460 = vmatprep.subr.mxu0 0.0
  %461 = vmatpush1.msra.mxu0 0.0
  %462 = vmatprep.subr.mxu0 0.0
  %463 = vmatpush1.msra.mxu0 0.0
  %464 = vmatprep.subr.mxu0 0.0
  %465 = vmatpush1.msra.mxu0 0.0
  %466 = vmatprep.subr.mxu0 0.0
  %467 = vmatpush1.msra.mxu0 0.0
  %468 = vmatprep.subr.mxu0 0.0
  %469 = vmatpush1.msra.mxu0 0.0
  %470 = vmatprep.subr.mxu0 0.0
  %471 = vmatpush1.msra.mxu0 0.0
  %472 = vmatprep.subr.mxu0 0.0
  %473 = vmatpush1.msra.mxu0 0.0
  %474 = vmatprep.subr.mxu0 0.0
  %475 = vmatpush1.msra.mxu0 0.0
  %476 = vmatprep.subr.mxu0 0.0
  %477 = vmatpush1.msra.mxu0 0.0
  %478 = vmatprep.subr.mxu0 0.0
  %479 = vmatpush1.msra.mxu0 0.0
  %480 = vmatprep.mubr.f32.mxu0 0.0
  %481 = vmatmul.mubr.f32.gmra.mrb[0].mxu0 %v386
  %v482 = vpop.f32.mrb[0].mxu0
  %v483 = vadd.f32 0.0, %v482
  %v484 = vpop.f32.mrb[0].mxu0
  %485 = vdwg.mxu0
  %486 = vmatprep.subr.mxu0 0.0
  %487 = vmatpush1.msra.mxu0 %v400
  %488 = vmatprep.subr.mxu0 0.0
  %489 = vmatpush1.msra.mxu0 %v401
  %490 = vmatprep.subr.mxu0 0.0
  %491 = vmatpush1.msra.mxu0 %v402
  %492 = vmatprep.subr.mxu0 0.0
  %493 = vmatpush1.msra.mxu0 %v403
  %494 = vmatprep.subr.mxu0 0.0
  %495 = vmatpush1.msra.mxu0 %v404
  %496 = vmatprep.subr.mxu0 0.0
  %497 = vmatpush1.msra.mxu0 %v405
  %498 = vmatprep.subr.mxu0 0.0
  %499 = vmatpush1.msra.mxu0 %v406
  %500 = vmatprep.subr.mxu0 0.0
  %501 = vmatpush1.msra.mxu0 %v407
  %502 = vmatprep.subr.mxu0 0.0
  %503 = vmatpush1.msra.mxu0 %v408
  %504 = vmatprep.subr.mxu0 0.0
  %505 = vmatpush1.msra.mxu0 %v409
  %506 = vmatprep.subr.mxu0 0.0
  %507 = vmatpush1.msra.mxu0 %v410
  %508 = vmatprep.subr.mxu0 0.0
  %509 = vmatpush1.msra.mxu0 %v411
  %510 = vmatprep.subr.mxu0 0.0
  %511 = vmatpush1.msra.mxu0 %v412
  %512 = vmatprep.subr.mxu0 0.0
  %513 = vmatpush1.msra.mxu0 %v413
  %514 = vmatprep.subr.mxu0 0.0
  %515 = vmatpush1.msra.mxu0 %v414
  %516 = vmatprep.subr.mxu0 0.0
  %517 = vmatpush1.msra.mxu0 %v415
  %518 = vmatprep.subr.mxu0 0.0
  %519 = vmatpush1.msra.mxu0 0.0
  %520 = vmatprep.subr.mxu0 0.0
  %521 = vmatpush1.msra.mxu0 0.0
  %522 = vmatprep.subr.mxu0 0.0
  %523 = vmatpush1.msra.mxu0 0.0
  %524 = vmatprep.subr.mxu0 0.0
  %525 = vmatpush1.msra.mxu0 0.0
  %526 = vmatprep.subr.mxu0 0.0
  %527 = vmatpush1.msra.mxu0 0.0
  %528 = vmatprep.subr.mxu0 0.0
  %529 = vmatpush1.msra.mxu0 0.0
  %530 = vmatprep.subr.mxu0 0.0
  %531 = vmatpush1.msra.mxu0 0.0
  %532 = vmatprep.subr.mxu0 0.0
  %533 = vmatpush1.msra.mxu0 0.0
  %534 = vmatprep.subr.mxu0 0.0
  %535 = vmatpush1.msra.mxu0 0.0
  %536 = vmatprep.subr.mxu0 0.0
  %537 = vmatpush1.msra.mxu0 0.0
  %538 = vmatprep.subr.mxu0 0.0
  %539 = vmatpush1.msra.mxu0 0.0
  %540 = vmatprep.subr.mxu0 0.0
  %541 = vmatpush1.msra.mxu0 0.0
  %542 = vmatprep.subr.mxu0 0.0
  %543 = vmatpush1.msra.mxu0 0.0
  %544 = vmatprep.subr.mxu0 0.0
  %545 = vmatpush1.msra.mxu0 0.0
  %546 = vmatprep.subr.mxu0 0.0
  %547 = vmatpush1.msra.mxu0 0.0
  %548 = vmatprep.subr.mxu0 0.0
  %549 = vmatpush1.msra.mxu0 0.0
  %550 = vmatprep.mubr.f32.mxu0 0.0
  %551 = vmatmul.mubr.f32.gmra.mrb[0].mxu0 %v399
  %v552 = vpop.f32.mrb[0].mxu0
  %v553 = vadd.f32 0.0, %v552
  %v554 = vpop.f32.mrb[0].mxu0
  %555 = vdwg.mxu0
  %v556 = vmul.f32 %v483, 0.001953125
  %v557 = vmul.f32 %v553, 0.001953125
  %v558 = vmul.f32 %v556, %v556
  %v559 = vsub.f32 %v557, %v558
  %v560 = vadd.f32 %v559, 1e-05
  %v561 = vrsqrt.pop %v560
  %v562 = vld [vmem:[%s3] sm:$0x1]
  %v563 = vmul.f32 %v562, %v561
  %v564 = vld [vmem:[%s4] sm:$0x1]
  %v565 = vmul.f32 %v556, %v563
  %v566 = vsub.f32 %v564, %v565
  %v567 = vld [vmem:[%s10] sm:$0xff]
  %vm568 = vcmask 64512
  %v570 = vsel %vm568, %v563, 0
  %572 = vmatprep.subr.mxu0 0.0
  %573 = vmatpush1.msra.mxu0 %v567
  %574 = vmatprep.subr.mxu0 0.0
  %575 = vmatpush1.msra.mxu0 0.0
  %576 = vmatprep.subr.mxu0 0.0
  %577 = vmatpush1.msra.mxu0 0.0
  %578 = vmatprep.subr.mxu0 0.0
  %579 = vmatpush1.msra.mxu0 0.0
  %580 = vmatprep.subr.mxu0 0.0
  %581 = vmatpush1.msra.mxu0 0.0
  %582 = vmatprep.subr.mxu0 0.0
  %583 = vmatpush1.msra.mxu0 0.0
  %584 = vmatprep.subr.mxu0 0.0
  %585 = vmatpush1.msra.mxu0 0.0
  %586 = vmatprep.subr.mxu0 0.0
  %587 = vmatpush1.msra.mxu0 0.0
  %588 = vmatprep.subr.mxu0 0.0
  %589 = vmatpush1.msra.mxu0 0.0
  %590 = vmatprep.subr.mxu0 0.0
  %591 = vmatpush1.msra.mxu0 0.0
  %592 = vmatprep.subr.mxu0 0.0
  %593 = vmatpush1.msra.mxu0 0.0
  %594 = vmatprep.subr.mxu0 0.0
  %595 = vmatpush1.msra.mxu0 0.0
  %596 = vmatprep.subr.mxu0 0.0
  %597 = vmatpush1.msra.mxu0 0.0
  %598 = vmatprep.subr.mxu0 0.0
  %599 = vmatpush1.msra.mxu0 0.0
  %600 = vmatprep.subr.mxu0 0.0
  %601 = vmatpush1.msra.mxu0 0.0
  %602 = vmatprep.subr.mxu0 0.0
  %603 = vmatpush1.msra.mxu0 0.0
  %604 = vmatprep.subr.mxu0 0.0
  %605 = vmatpush1.msra.mxu0 0.0
  %606 = vmatprep.subr.mxu0 0.0
  %607 = vmatpush1.msra.mxu0 0.0
  %608 = vmatprep.subr.mxu0 0.0
  %609 = vmatpush1.msra.mxu0 0.0
  %610 = vmatprep.subr.mxu0 0.0
  %611 = vmatpush1.msra.mxu0 0.0
  %612 = vmatprep.subr.mxu0 0.0
  %613 = vmatpush1.msra.mxu0 0.0
  %614 = vmatprep.subr.mxu0 0.0
  %615 = vmatpush1.msra.mxu0 0.0
  %616 = vmatprep.subr.mxu0 0.0
  %617 = vmatpush1.msra.mxu0 0.0
  %618 = vmatprep.subr.mxu0 0.0
  %619 = vmatpush1.msra.mxu0 0.0
  %620 = vmatprep.subr.mxu0 0.0
  %621 = vmatpush1.msra.mxu0 0.0
  %622 = vmatprep.subr.mxu0 0.0
  %623 = vmatpush1.msra.mxu0 0.0
  %624 = vmatprep.subr.mxu0 0.0
  %625 = vmatpush1.msra.mxu0 0.0
  %626 = vmatprep.subr.mxu0 0.0
  %627 = vmatpush1.msra.mxu0 0.0
  %628 = vmatprep.subr.mxu0 0.0
  %629 = vmatpush1.msra.mxu0 0.0
  %630 = vmatprep.subr.mxu0 0.0
  %631 = vmatpush1.msra.mxu0 0.0
  %632 = vmatprep.subr.mxu0 0.0
  %633 = vmatpush1.msra.mxu0 0.0
  %634 = vmatprep.subr.mxu0 0.0
  %635 = vmatpush1.msra.mxu0 0.0
  %636 = vmatprep.mubr.f32.mxu0 0.0
  %637 = vmatmul.mubr.f32.gmra.mrb[0].mxu0 %v570
  %v638 = vpop.f32.mrb[0].mxu0
  %v639 = vadd.f32 0.0, %v638
  %v640 = vpop.f32.mrb[0].mxu0
  %641 = vdwg.mxu0
  %v643 = vsel %vm568, %v566, 0
  %645 = vmatprep.subr.mxu0 0.0
  %646 = vmatpush1.msra.mxu0 %v567
  %647 = vmatprep.subr.mxu0 0.0
  %648 = vmatpush1.msra.mxu0 0.0
  %649 = vmatprep.subr.mxu0 0.0
  %650 = vmatpush1.msra.mxu0 0.0
  %651 = vmatprep.subr.mxu0 0.0
  %652 = vmatpush1.msra.mxu0 0.0
  %653 = vmatprep.subr.mxu0 0.0
  %654 = vmatpush1.msra.mxu0 0.0
  %655 = vmatprep.subr.mxu0 0.0
  %656 = vmatpush1.msra.mxu0 0.0
  %657 = vmatprep.subr.mxu0 0.0
  %658 = vmatpush1.msra.mxu0 0.0
  %659 = vmatprep.subr.mxu0 0.0
  %660 = vmatpush1.msra.mxu0 0.0
  %661 = vmatprep.subr.mxu0 0.0
  %662 = vmatpush1.msra.mxu0 0.0
  %663 = vmatprep.subr.mxu0 0.0
  %664 = vmatpush1.msra.mxu0 0.0
  %665 = vmatprep.subr.mxu0 0.0
  %666 = vmatpush1.msra.mxu0 0.0
  %667 = vmatprep.subr.mxu0 0.0
  %668 = vmatpush1.msra.mxu0 0.0
  %669 = vmatprep.subr.mxu0 0.0
  %670 = vmatpush1.msra.mxu0 0.0
  %671 = vmatprep.subr.mxu0 0.0
  %672 = vmatpush1.msra.mxu0 0.0
  %673 = vmatprep.subr.mxu0 0.0
  %674 = vmatpush1.msra.mxu0 0.0
  %675 = vmatprep.subr.mxu0 0.0
  %676 = vmatpush1.msra.mxu0 0.0
  %677 = vmatprep.subr.mxu0 0.0
  %678 = vmatpush1.msra.mxu0 0.0
  %679 = vmatprep.subr.mxu0 0.0
  %680 = vmatpush1.msra.mxu0 0.0
  %681 = vmatprep.subr.mxu0 0.0
  %682 = vmatpush1.msra.mxu0 0.0
  %683 = vmatprep.subr.mxu0 0.0
  %684 = vmatpush1.msra.mxu0 0.0
  %685 = vmatprep.subr.mxu0 0.0
  %686 = vmatpush1.msra.mxu0 0.0
  %687 = vmatprep.subr.mxu0 0.0
  %688 = vmatpush1.msra.mxu0 0.0
  %689 = vmatprep.subr.mxu0 0.0
  %690 = vmatpush1.msra.mxu0 0.0
  %691 = vmatprep.subr.mxu0 0.0
  %692 = vmatpush1.msra.mxu0 0.0
  %693 = vmatprep.subr.mxu0 0.0
  %694 = vmatpush1.msra.mxu0 0.0
  %695 = vmatprep.subr.mxu0 0.0
  %696 = vmatpush1.msra.mxu0 0.0
  %697 = vmatprep.subr.mxu0 0.0
  %698 = vmatpush1.msra.mxu0 0.0
  %699 = vmatprep.subr.mxu0 0.0
  %700 = vmatpush1.msra.mxu0 0.0
  %701 = vmatprep.subr.mxu0 0.0
  %702 = vmatpush1.msra.mxu0 0.0
  %703 = vmatprep.subr.mxu0 0.0
  %704 = vmatpush1.msra.mxu0 0.0
  %705 = vmatprep.subr.mxu0 0.0
  %706 = vmatpush1.msra.mxu0 0.0
  %707 = vmatprep.subr.mxu0 0.0
  %708 = vmatpush1.msra.mxu0 0.0
  %709 = vmatprep.mubr.f32.mxu0 0.0
  %710 = vmatmul.mubr.f32.gmra.mrb[0].mxu0 %v643
  %v711 = vpop.f32.mrb[0].mxu0
  %v712 = vadd.f32 0.0, %v711
  %v713 = vpop.f32.mrb[0].mxu0
  %714 = vdwg.mxu0
  %v715 = vlaneseq
  %v716 = vshrl.u32 %v715, 7
  %v717 = vsub.s32 0, %v716
  %v718 = vrot.slane %v639, %v717
  %v719 = vmul.f32 %v374, %v718
  %v720 = vmul.f32 %v375, %v718
  %v721 = vmul.f32 %v376, %v718
  %v722 = vmul.f32 %v377, %v718
  %v723 = vlaneseq
  %v724 = vshrl.u32 %v723, 7
  %v725 = vsub.s32 0, %v724
  %v726 = vrot.slane %v712, %v725
  %v727 = vadd.f32 %v719, %v726
  %v728 = vadd.f32 %v720, %v726
  %v729 = vadd.f32 %v721, %v726
  %v730 = vadd.f32 %v722, %v726
  %v731 = vmax.f32 %v727, 0.0
  %v732 = vmax.f32 %v728, 0.0
  %v733 = vmax.f32 %v729, 0.0
  %v734 = vmax.f32 %v730, 0.0
  %735 = vst [vmem:[#allocation2 + $0x1] sm:$0xff] %v731
  %736 = vst [vmem:[#allocation2 + $0x9] sm:$0xff] %v732
  %737 = vst [vmem:[#allocation2 + $0x19] sm:$0xff] %v733
  %738 = vst [vmem:[#allocation2 + $0x21] sm:$0xff] %v734
  %s739 = scalar_lea.vmem %s5, 128
  %v740 = vld [vmem:[%s739] sm:$0xff]
  %v741 = vld [vmem:[%s739 + $0x8] sm:$0xff]
  %v742 = vld [vmem:[%s739 + $0x10] sm:$0xff]
  %v743 = vld [vmem:[%s739 + $0x18] sm:$0xff]
  %v744 = vld [vmem:[%s739 + $0x20] sm:$0xff]
  %v745 = vld [vmem:[%s739 + $0x28] sm:$0xff]
  %v746 = vld [vmem:[%s739 + $0x30] sm:$0xff]
  %v747 = vld [vmem:[%s739 + $0x38] sm:$0xff]
  %v748 = vld [vmem:[%s739 + $0x40] sm:$0xff]
  %v749 = vld [vmem:[%s739 + $0x48] sm:$0xff]
  %v750 = vld [vmem:[%s739 + $0x50] sm:$0xff]
  %v751 = vld [vmem:[%s739 + $0x58] sm:$0xff]
  %v752 = vld [vmem:[%s739 + $0x60] sm:$0xff]
  %v753 = vld [vmem:[%s739 + $0x68] sm:$0xff]
  %v754 = vld [vmem:[%s739 + $0x70] sm:$0xff]
  %v755 = vld [vmem:[%s739 + $0x78] sm:$0xff]
  %v756 = vld [vmem:[#allocation2] sm:$0xff]
  %v757 = vld [vmem:[#allocation2 + $0x8] sm:$0xff]
  %v758 = vld [vmem:[#allocation2 + $0x18] sm:$0xff]
  %v759 = vld [vmem:[#allocation2 + $0x20] sm:$0xff]
  %v760 = vld [vmem:[%s5] sm:$0xff]
  %v761 = vld [vmem:[%s5 + $0x8] sm:$0xff]
  %v762 = vld [vmem:[%s5 + $0x10] sm:$0xff]
  %v763 = vld [vmem:[%s5 + $0x18] sm:$0xff]
  %v764 = vld [vmem:[%s5 + $0x20] sm:$0xff]
  %v765 = vld [vmem:[%s5 + $0x28] sm:$0xff]
  %v766 = vld [vmem:[%s5 + $0x30] sm:$0xff]
  %v767 = vld [vmem:[%s5 + $0x38] sm:$0xff]
  %v768 = vld [vmem:[%s5 + $0x40] sm:$0xff]
  %v769 = vld [vmem:[%s5 + $0x48] sm:$0xff]
  %v770 = vld [vmem:[%s5 + $0x50] sm:$0xff]
  %v771 = vld [vmem:[%s5 + $0x58] sm:$0xff]
  %v772 = vld [vmem:[%s5 + $0x60] sm:$0xff]
  %v773 = vld [vmem:[%s5 + $0x68] sm:$0xff]
  %v774 = vld [vmem:[%s5 + $0x70] sm:$0xff]
  %v775 = vld [vmem:[%s5 + $0x78] sm:$0xff]
  %776 = vmatprep.subr.mxu0 0.0
  %777 = vmatpush1.msra.mxu0 %v760
  %778 = vmatprep.subr.mxu0 0.0
  %779 = vmatpush1.msra.mxu0 %v761
  %780 = vmatprep.subr.mxu0 0.0
  %781 = vmatpush1.msra.mxu0 %v762
  %782 = vmatprep.subr.mxu0 0.0
  %783 = vmatpush1.msra.mxu0 %v763
  %784 = vmatprep.subr.mxu0 0.0
  %785 = vmatpush1.msra.mxu0 %v764
  %786 = vmatprep.subr.mxu0 0.0
  %787 = vmatpush1.msra.mxu0 %v765
  %788 = vmatprep.subr.mxu0 0.0
  %789 = vmatpush1.msra.mxu0 %v766
  %790 = vmatprep.subr.mxu0 0.0
  %791 = vmatpush1.msra.mxu0 %v767
  %792 = vmatprep.subr.mxu0 0.0
  %793 = vmatpush1.msra.mxu0 %v768
  %794 = vmatprep.subr.mxu0 0.0
  %795 = vmatpush1.msra.mxu0 %v769
  %796 = vmatprep.subr.mxu0 0.0
  %797 = vmatpush1.msra.mxu0 %v770
  %798 = vmatprep.subr.mxu0 0.0
  %799 = vmatpush1.msra.mxu0 %v771
  %800 = vmatprep.subr.mxu0 0.0
  %801 = vmatpush1.msra.mxu0 %v772
  %802 = vmatprep.subr.mxu0 0.0
  %803 = vmatpush1.msra.mxu0 %v773
  %804 = vmatprep.subr.mxu0 0.0
  %805 = vmatpush1.msra.mxu0 %v774
  %806 = vmatprep.subr.mxu0 0.0
  %807 = vmatpush1.msra.mxu0 %v775
  %808 = vmatprep.subr.mxu0 0.0
  %809 = vmatpush1.msra.mxu0 0.0
  %810 = vmatprep.subr.mxu0 0.0
  %811 = vmatpush1.msra.mxu0 0.0
  %812 = vmatprep.subr.mxu0 0.0
  %813 = vmatpush1.msra.mxu0 0.0
  %814 = vmatprep.subr.mxu0 0.0
  %815 = vmatpush1.msra.mxu0 0.0
  %816 = vmatprep.subr.mxu0 0.0
  %817 = vmatpush1.msra.mxu0 0.0
  %818 = vmatprep.subr.mxu0 0.0
  %819 = vmatpush1.msra.mxu0 0.0
  %820 = vmatprep.subr.mxu0 0.0
  %821 = vmatpush1.msra.mxu0 0.0
  %822 = vmatprep.subr.mxu0 0.0
  %823 = vmatpush1.msra.mxu0 0.0
  %824 = vmatprep.subr.mxu0 0.0
  %825 = vmatpush1.msra.mxu0 0.0
  %826 = vmatprep.subr.mxu0 0.0
  %827 = vmatpush1.msra.mxu0 0.0
  %828 = vmatprep.subr.mxu0 0.0
  %829 = vmatpush1.msra.mxu0 0.0
  %830 = vmatprep.subr.mxu0 0.0
  %831 = vmatpush1.msra.mxu0 0.0
  %832 = vmatprep.subr.mxu0 0.0
  %833 = vmatpush1.msra.mxu0 0.0
  %834 = vmatprep.subr.mxu0 0.0
  %835 = vmatpush1.msra.mxu0 0.0
  %836 = vmatprep.subr.mxu0 0.0
  %837 = vmatpush1.msra.mxu0 0.0
  %838 = vmatprep.subr.mxu0 0.0
  %839 = vmatpush1.msra.mxu0 0.0
  %840 = vmatprep.mubr.f32.mxu0 0.0
  %841 = vmatmul.mubr.f32.gmra.mrb[0].mxu0 %v756
  %v842 = vpop.f32.mrb[0].mxu0
  %v843 = vadd.f32 0.0, %v842
  %v844 = vpop.f32.mrb[0].mxu0
  %845 = vmatprep.mubr.f32.mxu0 0.0
  %846 = vmatmul.mubr.f32.gmra.mrb[0].mxu0 %v757
  %v847 = vpop.f32.mrb[0].mxu0
  %v848 = vadd.f32 0.0, %v847
  %v849 = vpop.f32.mrb[0].mxu0
  %850 = vmatprep.mubr.f32.mxu0 0.0
  %851 = vmatmul.mubr.f32.gmra.mrb[0].mxu0 %v758
  %v852 = vpop.f32.mrb[0].mxu0
  %v853 = vadd.f32 0.0, %v852
  %v854 = vpop.f32.mrb[0].mxu0
  %855 = vmatprep.mubr.f32.mxu0 0.0
  %856 = vmatmul.mubr.f32.gmra.mrb[0].mxu0 %v759
  %v857 = vpop.f32.mrb[0].mxu0
  %v858 = vadd.f32 0.0, %v857
  %v859 = vpop.f32.mrb[0].mxu0
  %860 = vdwg.mxu0
  %861 = vmatprep.subr.mxu0 0.0
  %862 = vmatpush1.msra.mxu0 %v740
  %863 = vmatprep.subr.mxu0 0.0
  %864 = vmatpush1.msra.mxu0 %v741
  %865 = vmatprep.subr.mxu0 0.0
  %866 = vmatpush1.msra.mxu0 %v742
  %867 = vmatprep.subr.mxu0 0.0
  %868 = vmatpush1.msra.mxu0 %v743
  %869 = vmatprep.subr.mxu0 0.0
  %870 = vmatpush1.msra.mxu0 %v744
  %871 = vmatprep.subr.mxu0 0.0
  %872 = vmatpush1.msra.mxu0 %v745
  %873 = vmatprep.subr.mxu0 0.0
  %874 = vmatpush1.msra.mxu0 %v746
  %875 = vmatprep.subr.mxu0 0.0
  %876 = vmatpush1.msra.mxu0 %v747
  %877 = vmatprep.subr.mxu0 0.0
  %878 = vmatpush1.msra.mxu0 %v748
  %879 = vmatprep.subr.mxu0 0.0
  %880 = vmatpush1.msra.mxu0 %v749
  %881 = vmatprep.subr.mxu0 0.0
  %882 = vmatpush1.msra.mxu0 %v750
  %883 = vmatprep.subr.mxu0 0.0
  %884 = vmatpush1.msra.mxu0 %v751
  %885 = vmatprep.subr.mxu0 0.0
  %886 = vmatpush1.msra.mxu0 %v752
  %887 = vmatprep.subr.mxu0 0.0
  %888 = vmatpush1.msra.mxu0 %v753
  %889 = vmatprep.subr.mxu0 0.0
  %890 = vmatpush1.msra.mxu0 %v754
  %891 = vmatprep.subr.mxu0 0.0
  %892 = vmatpush1.msra.mxu0 %v755
  %893 = vmatprep.subr.mxu0 0.0
  %894 = vmatpush1.msra.mxu0 0.0
  %895 = vmatprep.subr.mxu0 0.0
  %896 = vmatpush1.msra.mxu0 0.0
  %897 = vmatprep.subr.mxu0 0.0
  %898 = vmatpush1.msra.mxu0 0.0
  %899 = vmatprep.subr.mxu0 0.0
  %900 = vmatpush1.msra.mxu0 0.0
  %901 = vmatprep.subr.mxu0 0.0
  %902 = vmatpush1.msra.mxu0 0.0
  %903 = vmatprep.subr.mxu0 0.0
  %904 = vmatpush1.msra.mxu0 0.0
  %905 = vmatprep.subr.mxu0 0.0
  %906 = vmatpush1.msra.mxu0 0.0
  %907 = vmatprep.subr.mxu0 0.0
  %908 = vmatpush1.msra.mxu0 0.0
  %909 = vmatprep.subr.mxu0 0.0
  %910 = vmatpush1.msra.mxu0 0.0
  %911 = vmatprep.subr.mxu0 0.0
  %912 = vmatpush1.msra.mxu0 0.0
  %913 = vmatprep.subr.mxu0 0.0
  %914 = vmatpush1.msra.mxu0 0.0
  %915 = vmatprep.subr.mxu0 0.0
  %916 = vmatpush1.msra.mxu0 0.0
  %917 = vmatprep.subr.mxu0 0.0
  %918 = vmatpush1.msra.mxu0 0.0
  %919 = vmatprep.subr.mxu0 0.0
  %920 = vmatpush1.msra.mxu0 0.0
  %921 = vmatprep.subr.mxu0 0.0
  %922 = vmatpush1.msra.mxu0 0.0
  %923 = vmatprep.subr.mxu0 0.0
  %924 = vmatpush1.msra.mxu0 0.0
  %925 = vmatprep.mubr.f32.mxu0 0.0
  %926 = vmatmul.mubr.f32.gmra.mrb[0].mxu0 %v731
  %v927 = vpop.f32.mrb[0].mxu0
  %v928 = vadd.f32 %v843, %v927
  %v929 = vpop.f32.mrb[0].mxu0
  %930 = vmatprep.mubr.f32.mxu0 0.0
  %931 = vmatmul.mubr.f32.gmra.mrb[0].mxu0 %v732
  %v932 = vpop.f32.mrb[0].mxu0
  %v933 = vadd.f32 %v848, %v932
  %v934 = vpop.f32.mrb[0].mxu0
  %935 = vmatprep.mubr.f32.mxu0 0.0
  %936 = vmatmul.mubr.f32.gmra.mrb[0].mxu0 %v733
  %v937 = vpop.f32.mrb[0].mxu0
  %v938 = vadd.f32 %v853, %v937
  %v939 = vpop.f32.mrb[0].mxu0
  %940 = vmatprep.mubr.f32.mxu0 0.0
  %941 = vmatmul.mubr.f32.gmra.mrb[0].mxu0 %v734
  %v942 = vpop.f32.mrb[0].mxu0
  %v943 = vadd.f32 %v858, %v942
  %v944 = vpop.f32.mrb[0].mxu0
  %945 = vdwg.mxu0
  %v946 = vld [vmem:[#allocation2 + $0x2] sm:$0xff]
  %v947 = vld [vmem:[#allocation2 + $0xa] sm:$0xff]
  %v948 = vld [vmem:[#allocation2 + $0x1a] sm:$0xff]
  %v949 = vld [vmem:[#allocation2 + $0x22] sm:$0xff]
  %s950 = scalar_lea.vmem %s5, 256
  %v951 = vld [vmem:[%s950] sm:$0xff]
  %v952 = vld [vmem:[%s950 + $0x8] sm:$0xff]
  %v953 = vld [vmem:[%s950 + $0x10] sm:$0xff]
  %v954 = vld [vmem:[%s950 + $0x18] sm:$0xff]
  %v955 = vld [vmem:[%s950 + $0x20] sm:$0xff]
  %v956 = vld [vmem:[%s950 + $0x28] sm:$0xff]
  %v957 = vld [vmem:[%s950 + $0x30] sm:$0xff]
  %v958 = vld [vmem:[%s950 + $0x38] sm:$0xff]
  %v959 = vld [vmem:[%s950 + $0x40] sm:$0xff]
  %v960 = vld [vmem:[%s950 + $0x48] sm:$0xff]
  %v961 = vld [vmem:[%s950 + $0x50] sm:$0xff]
  %v962 = vld [vmem:[%s950 + $0x58] sm:$0xff]
  %v963 = vld [vmem:[%s950 + $0x60] sm:$0xff]
  %v964 = vld [vmem:[%s950 + $0x68] sm:$0xff]
  %v965 = vld [vmem:[%s950 + $0x70] sm:$0xff]
  %v966 = vld [vmem:[%s950 + $0x78] sm:$0xff]
  %967 = vmatprep.subr.mxu0 0.0
  %968 = vmatpush1.msra.mxu0 %v951
  %969 = vmatprep.subr.mxu0 0.0
  %970 = vmatpush1.msra.mxu0 %v952
  %971 = vmatprep.subr.mxu0 0.0
  %972 = vmatpush1.msra.mxu0 %v953
  %973 = vmatprep.subr.mxu0 0.0
  %974 = vmatpush1.msra.mxu0 %v954
  %975 = vmatprep.subr.mxu0 0.0
  %976 = vmatpush1.msra.mxu0 %v955
  %977 = vmatprep.subr.mxu0 0.0
  %978 = vmatpush1.msra.mxu0 %v956
  %979 = vmatprep.subr.mxu0 0.0
  %980 = vmatpush1.msra.mxu0 %v957
  %981 = vmatprep.subr.mxu0 0.0
  %982 = vmatpush1.msra.mxu0 %v958
  %983 = vmatprep.subr.mxu0 0.0
  %984 = vmatpush1.msra.mxu0 %v959
  %985 = vmatprep.subr.mxu0 0.0
  %986 = vmatpush1.msra.mxu0 %v960
  %987 = vmatprep.subr.mxu0 0.0
  %988 = vmatpush1.msra.mxu0 %v961
  %989 = vmatprep.subr.mxu0 0.0
  %990 = vmatpush1.msra.mxu0 %v962
  %991 = vmatprep.subr.mxu0 0.0
  %992 = vmatpush1.msra.mxu0 %v963
  %993 = vmatprep.subr.mxu0 0.0
  %994 = vmatpush1.msra.mxu0 %v964
  %995 = vmatprep.subr.mxu0 0.0
  %996 = vmatpush1.msra.mxu0 %v965
  %997 = vmatprep.subr.mxu0 0.0
  %998 = vmatpush1.msra.mxu0 %v966
  %999 = vmatprep.subr.mxu0 0.0
  %1000 = vmatpush1.msra.mxu0 0.0
  %1001 = vmatprep.subr.mxu0 0.0
  %1002 = vmatpush1.msra.mxu0 0.0
  %1003 = vmatprep.subr.mxu0 0.0
  %1004 = vmatpush1.msra.mxu0 0.0
  %1005 = vmatprep.subr.mxu0 0.0
  %1006 = vmatpush1.msra.mxu0 0.0
  %1007 = vmatprep.subr.mxu0 0.0
  %1008 = vmatpush1.msra.mxu0 0.0
  %1009 = vmatprep.subr.mxu0 0.0
  %1010 = vmatpush1.msra.mxu0 0.0
  %1011 = vmatprep.subr.mxu0 0.0
  %1012 = vmatpush1.msra.mxu0 0.0
  %1013 = vmatprep.subr.mxu0 0.0
  %1014 = vmatpush1.msra.mxu0 0.0
  %1015 = vmatprep.subr.mxu0 0.0
  %1016 = vmatpush1.msra.mxu0 0.0
  %1017 = vmatprep.subr.mxu0 0.0
  %1018 = vmatpush1.msra.mxu0 0.0
  %1019 = vmatprep.subr.mxu0 0.0
  %1020 = vmatpush1.msra.mxu0 0.0
  %1021 = vmatprep.subr.mxu0 0.0
  %1022 = vmatpush1.msra.mxu0 0.0
  %1023 = vmatprep.subr.mxu0 0.0
  %1024 = vmatpush1.msra.mxu0 0.0
  %1025 = vmatprep.subr.mxu0 0.0
  %1026 = vmatpush1.msra.mxu0 0.0
  %1027 = vmatprep.subr.mxu0 0.0
  %1028 = vmatpush1.msra.mxu0 0.0
  %1029 = vmatprep.subr.mxu0 0.0
  %1030 = vmatpush1.msra.mxu0 0.0
  %1031 = vmatprep.mubr.f32.mxu0 0.0
  %1032 = vmatmul.mubr.f32.gmra.mrb[0].mxu0 %v946
  %v1033 = vpop.f32.mrb[0].mxu0
  %v1034 = vadd.f32 0.0, %v1033
  %v1035 = vpop.f32.mrb[0].mxu0
  %1036 = vmatprep.mubr.f32.mxu0 0.0
  %1037 = vmatmul.mubr.f32.gmra.mrb[0].mxu0 %v947
  %v1038 = vpop.f32.mrb[0].mxu0
  %v1039 = vadd.f32 0.0, %v1038
  %v1040 = vpop.f32.mrb[0].mxu0
  %1041 = vmatprep.mubr.f32.mxu0 0.0
  %1042 = vmatmul.mubr.f32.gmra.mrb[0].mxu0 %v948
  %v1043 = vpop.f32.mrb[0].mxu0
  %v1044 = vadd.f32 0.0, %v1043
  %v1045 = vpop.f32.mrb[0].mxu0
  %1046 = vmatprep.mubr.f32.mxu0 0.0
  %1047 = vmatmul.mubr.f32.gmra.mrb[0].mxu0 %v949
  %v1048 = vpop.f32.mrb[0].mxu0
  %v1049 = vadd.f32 0.0, %v1048
  %v1050 = vpop.f32.mrb[0].mxu0
  %1051 = vdwg.mxu0
  %v1052 = vadd.f32 %v928, %v1034
  %v1053 = vadd.f32 %v933, %v1039
  %v1054 = vadd.f32 %v938, %v1044
  %v1055 = vadd.f32 %v943, %v1049
  %v1056 = vld [vmem:[%s6] sm:$0x1]
  %v1058 = vlaneseq
  %v1059 = vshrl.u32 %v1058, 7
  %v1060 = vsub.s32 0, %v1059
  %v1061 = vrot.slane %v1056, %v1060
  %v1063 = vadd.f32 %v1052, %v1061
  %v1064 = vadd.f32 %v1053, %v1061
  %v1065 = vadd.f32 %v1054, %v1061
  %v1066 = vadd.f32 %v1055, %v1061
  %v1067 = vadd.f32 %v1063, %v1064
  %v1068 = vadd.f32 %v1067, %v1065
  %v1069 = vadd.f32 %v1068, %v1066
  %v1070 = vrot.slane %v1069, 4
  %v1071 = vadd.f32 %v1069, %v1070
  %v1072 = vrot.slane %v1071, 2
  %v1073 = vadd.f32 %v1071, %v1072
  %v1074 = vrot.slane %v1073, 1
  %v1075 = vadd.f32 %v1073, %v1074
  %v1076 = vmul.f32 %v1063, %v1063
  %v1077 = vmul.f32 %v1064, %v1064
  %v1078 = vmul.f32 %v1065, %v1065
  %v1079 = vmul.f32 %v1066, %v1066
  %v1080 = vadd.f32 %v1076, %v1077
  %v1081 = vadd.f32 %v1080, %v1078
  %v1082 = vadd.f32 %v1081, %v1079
  %v1083 = vrot.slane %v1082, 4
  %v1084 = vadd.f32 %v1082, %v1083
  %v1085 = vrot.slane %v1084, 2
  %v1086 = vadd.f32 %v1084, %v1085
  %v1087 = vrot.slane %v1086, 1
  %v1088 = vadd.f32 %v1086, %v1087
  %v1089 = vld [vmem:[%s9] sm:$0xff]
  %v1090 = vld [vmem:[%s9 + $0x8] sm:$0xff]
  %v1091 = vld [vmem:[%s9 + $0x10] sm:$0xff]
  %v1092 = vld [vmem:[%s9 + $0x18] sm:$0xff]
  %v1093 = vld [vmem:[%s9 + $0x20] sm:$0xff]
  %v1094 = vld [vmem:[%s9 + $0x28] sm:$0xff]
  %v1095 = vld [vmem:[%s9 + $0x30] sm:$0xff]
  %v1096 = vld [vmem:[%s9 + $0x38] sm:$0xff]
  %v1097 = vld [vmem:[%s9 + $0x40] sm:$0xff]
  %v1098 = vld [vmem:[%s9 + $0x48] sm:$0xff]
  %v1099 = vld [vmem:[%s9 + $0x50] sm:$0xff]
  %v1100 = vld [vmem:[%s9 + $0x58] sm:$0xff]
  %v1101 = vld [vmem:[%s9 + $0x60] sm:$0xff]
  %v1102 = vld [vmem:[%s9 + $0x68] sm:$0xff]
  %v1103 = vld [vmem:[%s9 + $0x70] sm:$0xff]
  %v1104 = vld [vmem:[%s9 + $0x78] sm:$0xff]
  %1105 = vmatprep.subr.mxu0 0.0
  %1106 = vmatpush1.msra.mxu0 %v1089
  %1107 = vmatprep.subr.mxu0 0.0
  %1108 = vmatpush1.msra.mxu0 %v1090
  %1109 = vmatprep.subr.mxu0 0.0
  %1110 = vmatpush1.msra.mxu0 %v1091
  %1111 = vmatprep.subr.mxu0 0.0
  %1112 = vmatpush1.msra.mxu0 %v1092
  %1113 = vmatprep.subr.mxu0 0.0
  %1114 = vmatpush1.msra.mxu0 %v1093
  %1115 = vmatprep.subr.mxu0 0.0
  %1116 = vmatpush1.msra.mxu0 %v1094
  %1117 = vmatprep.subr.mxu0 0.0
  %1118 = vmatpush1.msra.mxu0 %v1095
  %1119 = vmatprep.subr.mxu0 0.0
  %1120 = vmatpush1.msra.mxu0 %v1096
  %1121 = vmatprep.subr.mxu0 0.0
  %1122 = vmatpush1.msra.mxu0 %v1097
  %1123 = vmatprep.subr.mxu0 0.0
  %1124 = vmatpush1.msra.mxu0 %v1098
  %1125 = vmatprep.subr.mxu0 0.0
  %1126 = vmatpush1.msra.mxu0 %v1099
  %1127 = vmatprep.subr.mxu0 0.0
  %1128 = vmatpush1.msra.mxu0 %v1100
  %1129 = vmatprep.subr.mxu0 0.0
  %1130 = vmatpush1.msra.mxu0 %v1101
  %1131 = vmatprep.subr.mxu0 0.0
  %1132 = vmatpush1.msra.mxu0 %v1102
  %1133 = vmatprep.subr.mxu0 0.0
  %1134 = vmatpush1.msra.mxu0 %v1103
  %1135 = vmatprep.subr.mxu0 0.0
  %1136 = vmatpush1.msra.mxu0 %v1104
  %1137 = vmatprep.subr.mxu0 0.0
  %1138 = vmatpush1.msra.mxu0 0.0
  %1139 = vmatprep.subr.mxu0 0.0
  %1140 = vmatpush1.msra.mxu0 0.0
  %1141 = vmatprep.subr.mxu0 0.0
  %1142 = vmatpush1.msra.mxu0 0.0
  %1143 = vmatprep.subr.mxu0 0.0
  %1144 = vmatpush1.msra.mxu0 0.0
  %1145 = vmatprep.subr.mxu0 0.0
  %1146 = vmatpush1.msra.mxu0 0.0
  %1147 = vmatprep.subr.mxu0 0.0
  %1148 = vmatpush1.msra.mxu0 0.0
  %1149 = vmatprep.subr.mxu0 0.0
  %1150 = vmatpush1.msra.mxu0 0.0
  %1151 = vmatprep.subr.mxu0 0.0
  %1152 = vmatpush1.msra.mxu0 0.0
  %1153 = vmatprep.subr.mxu0 0.0
  %1154 = vmatpush1.msra.mxu0 0.0
  %1155 = vmatprep.subr.mxu0 0.0
  %1156 = vmatpush1.msra.mxu0 0.0
  %1157 = vmatprep.subr.mxu0 0.0
  %1158 = vmatpush1.msra.mxu0 0.0
  %1159 = vmatprep.subr.mxu0 0.0
  %1160 = vmatpush1.msra.mxu0 0.0
  %1161 = vmatprep.subr.mxu0 0.0
  %1162 = vmatpush1.msra.mxu0 0.0
  %1163 = vmatprep.subr.mxu0 0.0
  %1164 = vmatpush1.msra.mxu0 0.0
  %1165 = vmatprep.subr.mxu0 0.0
  %1166 = vmatpush1.msra.mxu0 0.0
  %1167 = vmatprep.subr.mxu0 0.0
  %1168 = vmatpush1.msra.mxu0 0.0
  %1169 = vmatprep.mubr.f32.mxu0 0.0
  %1170 = vmatmul.mubr.f32.gmra.mrb[0].mxu0 %v1075
  %v1171 = vpop.f32.mrb[0].mxu0
  %v1172 = vadd.f32 0.0, %v1171
  %v1173 = vpop.f32.mrb[0].mxu0
  %1174 = vdwg.mxu0
  %1175 = vmatprep.subr.mxu0 0.0
  %1176 = vmatpush1.msra.mxu0 %v1089
  %1177 = vmatprep.subr.mxu0 0.0
  %1178 = vmatpush1.msra.mxu0 %v1090
  %1179 = vmatprep.subr.mxu0 0.0
  %1180 = vmatpush1.msra.mxu0 %v1091
  %1181 = vmatprep.subr.mxu0 0.0
  %1182 = vmatpush1.msra.mxu0 %v1092
  %1183 = vmatprep.subr.mxu0 0.0
  %1184 = vmatpush1.msra.mxu0 %v1093
  %1185 = vmatprep.subr.mxu0 0.0
  %1186 = vmatpush1.msra.mxu0 %v1094
  %1187 = vmatprep.subr.mxu0 0.0
  %1188 = vmatpush1.msra.mxu0 %v1095
  %1189 = vmatprep.subr.mxu0 0.0
  %1190 = vmatpush1.msra.mxu0 %v1096
  %1191 = vmatprep.subr.mxu0 0.0
  %1192 = vmatpush1.msra.mxu0 %v1097
  %1193 = vmatprep.subr.mxu0 0.0
  %1194 = vmatpush1.msra.mxu0 %v1098
  %1195 = vmatprep.subr.mxu0 0.0
  %1196 = vmatpush1.msra.mxu0 %v1099
  %1197 = vmatprep.subr.mxu0 0.0
  %1198 = vmatpush1.msra.mxu0 %v1100
  %1199 = vmatprep.subr.mxu0 0.0
  %1200 = vmatpush1.msra.mxu0 %v1101
  %1201 = vmatprep.subr.mxu0 0.0
  %1202 = vmatpush1.msra.mxu0 %v1102
  %1203 = vmatprep.subr.mxu0 0.0
  %1204 = vmatpush1.msra.mxu0 %v1103
  %1205 = vmatprep.subr.mxu0 0.0
  %1206 = vmatpush1.msra.mxu0 %v1104
  %1207 = vmatprep.subr.mxu0 0.0
  %1208 = vmatpush1.msra.mxu0 0.0
  %1209 = vmatprep.subr.mxu0 0.0
  %1210 = vmatpush1.msra.mxu0 0.0
  %1211 = vmatprep.subr.mxu0 0.0
  %1212 = vmatpush1.msra.mxu0 0.0
  %1213 = vmatprep.subr.mxu0 0.0
  %1214 = vmatpush1.msra.mxu0 0.0
  %1215 = vmatprep.subr.mxu0 0.0
  %1216 = vmatpush1.msra.mxu0 0.0
  %1217 = vmatprep.subr.mxu0 0.0
  %1218 = vmatpush1.msra.mxu0 0.0
  %1219 = vmatprep.subr.mxu0 0.0
  %1220 = vmatpush1.msra.mxu0 0.0
  %1221 = vmatprep.subr.mxu0 0.0
  %1222 = vmatpush1.msra.mxu0 0.0
  %1223 = vmatprep.subr.mxu0 0.0
  %1224 = vmatpush1.msra.mxu0 0.0
  %1225 = vmatprep.subr.mxu0 0.0
  %1226 = vmatpush1.msra.mxu0 0.0
  %1227 = vmatprep.subr.mxu0 0.0
  %1228 = vmatpush1.msra.mxu0 0.0
  %1229 = vmatprep.subr.mxu0 0.0
  %1230 = vmatpush1.msra.mxu0 0.0
  %1231 = vmatprep.subr.mxu0 0.0
  %1232 = vmatpush1.msra.mxu0 0.0
  %1233 = vmatprep.subr.mxu0 0.0
  %1234 = vmatpush1.msra.mxu0 0.0
  %1235 = vmatprep.subr.mxu0 0.0
  %1236 = vmatpush1.msra.mxu0 0.0
  %1237 = vmatprep.subr.mxu0 0.0
  %1238 = vmatpush1.msra.mxu0 0.0
  %1239 = vmatprep.mubr.f32.mxu0 0.0
  %1240 = vmatmul.mubr.f32.gmra.mrb[0].mxu0 %v1088
  %v1241 = vpop.f32.mrb[0].mxu0
  %v1242 = vadd.f32 0.0, %v1241
  %v1243 = vpop.f32.mrb[0].mxu0
  %1244 = vdwg.mxu0
  %v1245 = vmul.f32 %v1172, 0.001953125
  %v1246 = vmul.f32 %v1242, 0.001953125
  %v1247 = vmul.f32 %v1245, %v1245
  %v1248 = vsub.f32 %v1246, %v1247
  %v1249 = vadd.f32 %v1248, 1e-05
  %v1250 = vrsqrt.pop %v1249
  %v1251 = vld [vmem:[%s7] sm:$0x1]
  %v1252 = vmul.f32 %v1251, %v1250
  %v1253 = vld [vmem:[%s8] sm:$0x1]
  %v1254 = vmul.f32 %v1245, %v1252
  %v1255 = vsub.f32 %v1253, %v1254
  %v1256 = vld [vmem:[%s10] sm:$0xff]
  %v1258 = vsel %vm568, %v1252, 0
  %1260 = vmatprep.subr.mxu0 0.0
  %1261 = vmatpush1.msra.mxu0 %v1256
  %1262 = vmatprep.subr.mxu0 0.0
  %1263 = vmatpush1.msra.mxu0 0.0
  %1264 = vmatprep.subr.mxu0 0.0
  %1265 = vmatpush1.msra.mxu0 0.0
  %1266 = vmatprep.subr.mxu0 0.0
  %1267 = vmatpush1.msra.mxu0 0.0
  %1268 = vmatprep.subr.mxu0 0.0
  %1269 = vmatpush1.msra.mxu0 0.0
  %1270 = vmatprep.subr.mxu0 0.0
  %1271 = vmatpush1.msra.mxu0 0.0
  %1272 = vmatprep.subr.mxu0 0.0
  %1273 = vmatpush1.msra.mxu0 0.0
  %1274 = vmatprep.subr.mxu0 0.0
  %1275 = vmatpush1.msra.mxu0 0.0
  %1276 = vmatprep.subr.mxu0 0.0
  %1277 = vmatpush1.msra.mxu0 0.0
  %1278 = vmatprep.subr.mxu0 0.0
  %1279 = vmatpush1.msra.mxu0 0.0
  %1280 = vmatprep.subr.mxu0 0.0
  %1281 = vmatpush1.msra.mxu0 0.0
  %1282 = vmatprep.subr.mxu0 0.0
  %1283 = vmatpush1.msra.mxu0 0.0
  %1284 = vmatprep.subr.mxu0 0.0
  %1285 = vmatpush1.msra.mxu0 0.0
  %1286 = vmatprep.subr.mxu0 0.0
  %1287 = vmatpush1.msra.mxu0 0.0
  %1288 = vmatprep.subr.mxu0 0.0
  %1289 = vmatpush1.msra.mxu0 0.0
  %1290 = vmatprep.subr.mxu0 0.0
  %1291 = vmatpush1.msra.mxu0 0.0
  %1292 = vmatprep.subr.mxu0 0.0
  %1293 = vmatpush1.msra.mxu0 0.0
  %1294 = vmatprep.subr.mxu0 0.0
  %1295 = vmatpush1.msra.mxu0 0.0
  %1296 = vmatprep.subr.mxu0 0.0
  %1297 = vmatpush1.msra.mxu0 0.0
  %1298 = vmatprep.subr.mxu0 0.0
  %1299 = vmatpush1.msra.mxu0 0.0
  %1300 = vmatprep.subr.mxu0 0.0
  %1301 = vmatpush1.msra.mxu0 0.0
  %1302 = vmatprep.subr.mxu0 0.0
  %1303 = vmatpush1.msra.mxu0 0.0
  %1304 = vmatprep.subr.mxu0 0.0
  %1305 = vmatpush1.msra.mxu0 0.0
  %1306 = vmatprep.subr.mxu0 0.0
  %1307 = vmatpush1.msra.mxu0 0.0
  %1308 = vmatprep.subr.mxu0 0.0
  %1309 = vmatpush1.msra.mxu0 0.0
  %1310 = vmatprep.subr.mxu0 0.0
  %1311 = vmatpush1.msra.mxu0 0.0
  %1312 = vmatprep.subr.mxu0 0.0
  %1313 = vmatpush1.msra.mxu0 0.0
  %1314 = vmatprep.subr.mxu0 0.0
  %1315 = vmatpush1.msra.mxu0 0.0
  %1316 = vmatprep.subr.mxu0 0.0
  %1317 = vmatpush1.msra.mxu0 0.0
  %1318 = vmatprep.subr.mxu0 0.0
  %1319 = vmatpush1.msra.mxu0 0.0
  %1320 = vmatprep.subr.mxu0 0.0
  %1321 = vmatpush1.msra.mxu0 0.0
  %1322 = vmatprep.subr.mxu0 0.0
  %1323 = vmatpush1.msra.mxu0 0.0
  %1324 = vmatprep.mubr.f32.mxu0 0.0
  %1325 = vmatmul.mubr.f32.gmra.mrb[0].mxu0 %v1258
  %v1326 = vpop.f32.mrb[0].mxu0
  %v1327 = vadd.f32 0.0, %v1326
  %v1328 = vpop.f32.mrb[0].mxu0
  %1329 = vdwg.mxu0
  %v1331 = vsel %vm568, %v1255, 0
  %1333 = vmatprep.subr.mxu0 0.0
  %1334 = vmatpush1.msra.mxu0 %v1256
  %1335 = vmatprep.subr.mxu0 0.0
  %1336 = vmatpush1.msra.mxu0 0.0
  %1337 = vmatprep.subr.mxu0 0.0
  %1338 = vmatpush1.msra.mxu0 0.0
  %1339 = vmatprep.subr.mxu0 0.0
  %1340 = vmatpush1.msra.mxu0 0.0
  %1341 = vmatprep.subr.mxu0 0.0
  %1342 = vmatpush1.msra.mxu0 0.0
  %1343 = vmatprep.subr.mxu0 0.0
  %1344 = vmatpush1.msra.mxu0 0.0
  %1345 = vmatprep.subr.mxu0 0.0
  %1346 = vmatpush1.msra.mxu0 0.0
  %1347 = vmatprep.subr.mxu0 0.0
  %1348 = vmatpush1.msra.mxu0 0.0
  %1349 = vmatprep.subr.mxu0 0.0
  %1350 = vmatpush1.msra.mxu0 0.0
  %1351 = vmatprep.subr.mxu0 0.0
  %1352 = vmatpush1.msra.mxu0 0.0
  %1353 = vmatprep.subr.mxu0 0.0
  %1354 = vmatpush1.msra.mxu0 0.0
  %1355 = vmatprep.subr.mxu0 0.0
  %1356 = vmatpush1.msra.mxu0 0.0
  %1357 = vmatprep.subr.mxu0 0.0
  %1358 = vmatpush1.msra.mxu0 0.0
  %1359 = vmatprep.subr.mxu0 0.0
  %1360 = vmatpush1.msra.mxu0 0.0
  %1361 = vmatprep.subr.mxu0 0.0
  %1362 = vmatpush1.msra.mxu0 0.0
  %1363 = vmatprep.subr.mxu0 0.0
  %1364 = vmatpush1.msra.mxu0 0.0
  %1365 = vmatprep.subr.mxu0 0.0
  %1366 = vmatpush1.msra.mxu0 0.0
  %1367 = vmatprep.subr.mxu0 0.0
  %1368 = vmatpush1.msra.mxu0 0.0
  %1369 = vmatprep.subr.mxu0 0.0
  %1370 = vmatpush1.msra.mxu0 0.0
  %1371 = vmatprep.subr.mxu0 0.0
  %1372 = vmatpush1.msra.mxu0 0.0
  %1373 = vmatprep.subr.mxu0 0.0
  %1374 = vmatpush1.msra.mxu0 0.0
  %1375 = vmatprep.subr.mxu0 0.0
  %1376 = vmatpush1.msra.mxu0 0.0
  %1377 = vmatprep.subr.mxu0 0.0
  %1378 = vmatpush1.msra.mxu0 0.0
  %1379 = vmatprep.subr.mxu0 0.0
  %1380 = vmatpush1.msra.mxu0 0.0
  %1381 = vmatprep.subr.mxu0 0.0
  %1382 = vmatpush1.msra.mxu0 0.0
  %1383 = vmatprep.subr.mxu0 0.0
  %1384 = vmatpush1.msra.mxu0 0.0
  %1385 = vmatprep.subr.mxu0 0.0
  %1386 = vmatpush1.msra.mxu0 0.0
  %1387 = vmatprep.subr.mxu0 0.0
  %1388 = vmatpush1.msra.mxu0 0.0
  %1389 = vmatprep.subr.mxu0 0.0
  %1390 = vmatpush1.msra.mxu0 0.0
  %1391 = vmatprep.subr.mxu0 0.0
  %1392 = vmatpush1.msra.mxu0 0.0
  %1393 = vmatprep.subr.mxu0 0.0
  %1394 = vmatpush1.msra.mxu0 0.0
  %1395 = vmatprep.subr.mxu0 0.0
  %1396 = vmatpush1.msra.mxu0 0.0
  %1397 = vmatprep.mubr.f32.mxu0 0.0
  %1398 = vmatmul.mubr.f32.gmra.mrb[0].mxu0 %v1331
  %v1399 = vpop.f32.mrb[0].mxu0
  %v1400 = vadd.f32 0.0, %v1399
  %v1401 = vpop.f32.mrb[0].mxu0
  %1402 = vdwg.mxu0
  %v1403 = vlaneseq
  %v1404 = vshrl.u32 %v1403, 7
  %v1405 = vsub.s32 0, %v1404
  %v1406 = vrot.slane %v1327, %v1405
  %v1407 = vmul.f32 %v1063, %v1406
  %v1408 = vmul.f32 %v1064, %v1406
  %v1409 = vmul.f32 %v1065, %v1406
  %v1410 = vmul.f32 %v1066, %v1406
  %v1411 = vlaneseq
  %v1412 = vshrl.u32 %v1411, 7
  %v1413 = vsub.s32 0, %v1412
  %v1414 = vrot.slane %v1400, %v1413
  %v1415 = vadd.f32 %v1407, %v1414
  %v1416 = vadd.f32 %v1408, %v1414
  %v1417 = vadd.f32 %v1409, %v1414
  %v1418 = vadd.f32 %v1410, %v1414
  %v1419 = vmul.f32 %v42, 0.5
  %v1420 = vmul.f32 %v43, 0.5
  %v1421 = vmul.f32 %v44, 0.5
  %v1422 = vmul.f32 %v45, 0.5
  %v1423 = vadd.f32 %v1415, %v1419
  %v1424 = vadd.f32 %v1416, %v1420
  %v1425 = vadd.f32 %v1417, %v1421
  %v1426 = vadd.f32 %v1418, %v1422
  %v1427 = vmax.f32 %v1423, 0.0
  %v1428 = vmax.f32 %v1424, 0.0
  %v1429 = vmax.f32 %v1425, 0.0
  %v1430 = vmax.f32 %v1426, 0.0
  %1431 = vst [vmem:[%s11] sm:$0xff] %v1427
  %1432 = vst [vmem:[%s11 + $0x8] sm:$0xff] %v1428
  %1433 = vst [vmem:[%s11 + $0x10] sm:$0xff] %v1429
  %1434 = vst [vmem:[%s11 + $0x18] sm:$0xff] %v1430
  // Predicated region
  $region46: #{resnet_block.1} parent=0 // pred_check
    _
  $region47: #{resnet_block.1} parent=0 // pred_check_branch
    %1436 = sbr.rel (0) target = $region49
  $region48: #{resnet_block.1} parent=0 // pred_region
    _
  $region49: #{resnet_block.1} parent=0 // pred_fallthru
    _
  // Predicated region
  $region50: #{resnet_block.1} parent=0 // pred_check
    _
  $region51: #{resnet_block.1} parent=0 // pred_check_branch
    %1438 = sbr.rel (0) target = $region53
  $region52: #{resnet_block.1} parent=0 // pred_region
    _
  $region53: #{resnet_block.1} parent=0 // pred_fallthru
    _

</llo_original>
